<compile_context>
chip_gen: v7x
topology: tpu7x:2x2x1
jax: 0.10.0
libtpu: 0.0.40
codegen_flags: <defaults>
</compile_context>

<pallas_src>
import jax
import jax.numpy as jnp
from jax.experimental import pallas as pl
from jax.experimental.pallas import tpu as pltpu


def _round_up(x, m):
    return (x + m - 1) // m * m


def fused_gcn_kernel(a_ref, x_ref, w1_ref, b1_ref, w2_ref, b2_ref,
                     o_ref, xw_ref, hw_ref, acc_ref):
    """One grid step of the fused 2-layer GCN.

    grid = (layer l in {0,1}, node-row tile m, contraction tile k over nodes)

    layer 0:  acc[m] += A[m, k] @ (X W1)[k]                       (K loop)
              k==last: H1 = relu(acc + b1); (H1 @ W2)[m] -> VMEM  (epilogue)
    layer 1:  acc[m] += A[m, k] @ (H1 W2)[k]                      (K loop)
              k==last: Out[m] = acc + b2    (lane-dense store)    (epilogue)
    """
    l = pl.program_id(0)
    m = pl.program_id(1)
    k = pl.program_id(2)
    k_last = pl.num_programs(2) - 1
    tm, tk = a_ref.shape

    # One-time feature transform XW1 = X @ W1, kept resident in VMEM and
    # reused by every A row tile of layer 0.
    @pl.when((l == 0) & (m == 0) & (k == 0))
    def _():
        xw_ref[...] = jnp.dot(
            x_ref[...], w1_ref[...],
            preferred_element_type=jnp.float32).astype(xw_ref.dtype)

    # Zero the f32 accumulator at the start of each (layer, row-tile) reduction.
    @pl.when(k == 0)
    def _():
        acc_ref[...] = jnp.zeros_like(acc_ref)

    a_blk = a_ref[...]                              # (tm, tk) bf16
    koff = pl.multiple_of(k * tk, tk)

    # Layer-0 inner step: aggregate the pre-transformed features.
    @pl.when(l == 0)
    def _():
        acc_ref[...] += jnp.dot(a_blk, xw_ref[pl.ds(koff, tk), :],
                                preferred_element_type=jnp.float32)

    # Layer-1 inner step: aggregate the (H1 @ W2) rows cached in VMEM.
    @pl.when(l == 1)
    def _():
        acc_ref[...] += jnp.dot(a_blk, hw_ref[pl.ds(koff, tk), :],
                                preferred_element_type=jnp.float32)

    # Layer-0 reduction-finalize: bias + ReLU once per row tile, then fold in
    # W2 so the intermediate activation never leaves VMEM.
    @pl.when((l == 0) & (k == k_last))
    def _():
        h1 = jnp.maximum(acc_ref[...] + b1_ref[...], 0.0)     # (tm, Fp) f32
        moff = pl.multiple_of(m * tm, tm)
        hw_ref[pl.ds(moff, tm), :] = jnp.dot(
            h1.astype(w2_ref.dtype), w2_ref[...],
            preferred_element_type=jnp.float32).astype(hw_ref.dtype)

    # Layer-1 reduction-finalize: bias + lane-dense logits store.
    @pl.when((l == 1) & (k == k_last))
    def _():
        o_ref[...] = (acc_ref[...] + b2_ref[...]).astype(o_ref.dtype)


def gcn_forward(a_norm, in_feat, params, *, tm=256, tk=256):
    """Two-layer GCN forward: conv1 -> ReLU -> conv2 (logits)."""
    n = a_norm.shape[0]
    f_in = in_feat.shape[1]
    h_feats = params["w1"].shape[1]
    num_classes = params["w2"].shape[1]

    # Lane-dense padding: feature dims to 128, node dim to the tile size.
    n_pad = _round_up(n, max(tm, tk))
    f_in_pad = _round_up(f_in, 128)
    fo_pad = max(_round_up(h_feats, 128), _round_up(num_classes, 128))

    bf16 = jnp.bfloat16
    a_p = jnp.zeros((n_pad, n_pad), bf16).at[:n, :n].set(a_norm.astype(bf16))
    x_p = jnp.zeros((n_pad, f_in_pad), bf16).at[:n, :f_in].set(
        in_feat.astype(bf16))
    w1_p = jnp.zeros((f_in_pad, fo_pad), bf16).at[:f_in, :h_feats].set(
        params["w1"].astype(bf16))
    b1_p = jnp.zeros((1, fo_pad), jnp.float32).at[0, :h_feats].set(params["b1"])
    w2_p = jnp.zeros((fo_pad, fo_pad), bf16).at[:h_feats, :num_classes].set(
        params["w2"].astype(bf16))
    b2_p = jnp.zeros((1, fo_pad), jnp.float32).at[0, :num_classes].set(
        params["b2"])

    grid = (2, n_pad // tm, n_pad // tk)   # (layer, node-row tile, K tile)

    # Rough VMEM budget (double-buffered A/out tiles + resident operands +
    # scratches) with 2x headroom, kept well under v7x's 64 MiB physical VMEM.
    vmem_est = (2 * tm * tk * 2                       # A tile (bf16, 2 bufs)
                + 2 * n_pad * f_in_pad * 2            # X (resident)
                + 2 * (f_in_pad + fo_pad) * fo_pad * 2  # W1, W2
                + 2 * 2 * fo_pad * 4                  # biases
                + 2 * tm * fo_pad * 4                 # out tile (f32, 2 bufs)
                + 2 * n_pad * fo_pad * 2              # XW1 + H1W2 scratches
                + tm * fo_pad * 4)                    # accumulator
    vmem_limit = int(min(max(2 * vmem_est, 32 * 1024 * 1024),
                         48 * 1024 * 1024))

    flops = (2 * n_pad * f_in_pad * fo_pad            # X @ W1
             + 2 * 2 * n_pad * n_pad * fo_pad         # two A aggregations
             + 2 * n_pad * fo_pad * fo_pad)           # H1 @ W2
    bytes_accessed = (2 * n_pad * n_pad * 2           # A read once per layer
                      + n_pad * f_in_pad * 2
                      + (f_in_pad + fo_pad) * fo_pad * 2
                      + 2 * fo_pad * 4
                      + n_pad * fo_pad * 4)

    out_p = pl.pallas_call(
        fused_gcn_kernel,
        out_shape=jax.ShapeDtypeStruct((n_pad, fo_pad), jnp.float32),
        grid_spec=pltpu.PrefetchScalarGridSpec(
            num_scalar_prefetch=0,
            grid=grid,
            in_specs=[
                pl.BlockSpec((tm, tk), lambda l, m, k: (m, k)),           # A
                pl.BlockSpec((n_pad, f_in_pad), lambda l, m, k: (0, 0)),  # X
                pl.BlockSpec((f_in_pad, fo_pad), lambda l, m, k: (0, 0)), # W1
                pl.BlockSpec((1, fo_pad), lambda l, m, k: (0, 0)),        # b1
                pl.BlockSpec((fo_pad, fo_pad), lambda l, m, k: (0, 0)),   # W2
                pl.BlockSpec((1, fo_pad), lambda l, m, k: (0, 0)),        # b2
            ],
            # The output is only written during layer 1; parking its block
            # index at (0, 0) throughout layer 0 keeps the visit order
            # monotone (each output block is fully written exactly once, at
            # its k == last step, before it is left).
            out_specs=pl.BlockSpec((tm, fo_pad), lambda l, m, k: (m * l, 0)),
            scratch_shapes=[
                pltpu.VMEM((n_pad, fo_pad), bf16),       # XW1   (resident)
                pltpu.VMEM((n_pad, fo_pad), bf16),       # H1@W2 (resident)
                pltpu.VMEM((tm, fo_pad), jnp.float32),   # f32 accumulator
            ],
        ),
        compiler_params=pltpu.CompilerParams(
            # Fused layers + shared VMEM scratches need sequential grid order.
            dimension_semantics=("arbitrary", "arbitrary", "arbitrary"),
            vmem_limit_bytes=vmem_limit,
        ),
        cost_estimate=pl.CostEstimate(
            flops=flops, transcendentals=0, bytes_accessed=bytes_accessed),
    )(a_p, x_p, w1_p, b1_p, w2_p, b2_p)

    return out_p[:n, :num_classes]


def build_normalized_adjacency(key, n):
    """Random undirected graph + self-loops, symmetric 'both' normalization."""
    upper = jax.random.bernoulli(key, p=0.05, shape=(n, n)).astype(jnp.float32)
    adj = jnp.triu(upper, k=1)
    adj = adj + adj.T                           # symmetrize (undirected)
    adj = adj + jnp.eye(n, dtype=jnp.float32)   # add self-loops
    deg = jnp.sum(adj, axis=1)
    d_inv_sqrt = 1.0 / jnp.sqrt(jnp.maximum(deg, 1.0))
    return adj * d_inv_sqrt[:, None] * d_inv_sqrt[None, :]


def init_params(key, in_feats, h_feats, num_classes):
    k1, k2, k3, k4 = jax.random.split(key, 4)
    lim1 = jnp.sqrt(6.0 / (in_feats + h_feats))
    lim2 = jnp.sqrt(6.0 / (h_feats + num_classes))
    return {
        "w1": jax.random.uniform(k1, (in_feats, h_feats), jnp.float32, -lim1, lim1),
        "b1": jax.random.uniform(k3, (h_feats,), jnp.float32, -0.1, 0.1),
        "w2": jax.random.uniform(k2, (h_feats, num_classes), jnp.float32, -lim2, lim2),
        "b2": jax.random.uniform(k4, (num_classes,), jnp.float32, -0.1, 0.1),
    }


def gcn_reference(a_norm, in_feat, params):
    """Pure-JAX reference with the same bf16 input rounding, f32 math."""
    c = lambda t: t.astype(jnp.bfloat16).astype(jnp.float32)
    a, x = c(a_norm), c(in_feat)
    w1, w2 = c(params["w1"]), c(params["w2"])
    h = jnp.maximum(a @ (x @ w1) + params["b1"], 0.0)
    return a @ (h @ w2) + params["b2"]


if __name__ == "__main__":
    # Small synthetic "Cora-like" graph (no file I/O / dgl dependency).
    N = 400          # nodes (pads to 512 -> exercises row/K tiling + padding)
    IN_FEATS = 100   # pads to 128
    H_FEATS = 32     # pads to 128
    NUM_CLASSES = 7  # pads to 128 (lane-dense logits)

    root = jax.random.PRNGKey(0)
    k_graph, k_feat, k_param = jax.random.split(root, 3)

    a_norm = build_normalized_adjacency(k_graph, N)
    in_feat = jax.random.normal(k_feat, (N, IN_FEATS), jnp.float32)
    params = init_params(k_param, IN_FEATS, H_FEATS, NUM_CLASSES)

    out = gcn_forward(a_norm, in_feat, params)
    out = jax.block_until_ready(out)

    ref = gcn_reference(a_norm, in_feat, params)
    assert out.shape == (N, NUM_CLASSES)
    # bf16 operands with f32 accumulation -> bf16-level tolerance.
    assert jnp.allclose(out, ref, atol=2e-2, rtol=2e-2), (
        float(jnp.max(jnp.abs(out - ref))))

    print("KERNEL_OK")
</pallas_src>

<mosaic_0001>
module attributes {stable_mosaic.version = 11 : i64} {
  func.func @fused_gcn_kernel(%arg0: i32, %arg1: i32, %arg2: i32, %arg3: memref<256x256xbf16, #tpu.memory_space<vmem>>, %arg4: memref<512x128xbf16, #tpu.memory_space<vmem>>, %arg5: memref<128x128xbf16, #tpu.memory_space<vmem>>, %arg6: memref<1x128xf32, #tpu.memory_space<vmem>>, %arg7: memref<128x128xbf16, #tpu.memory_space<vmem>>, %arg8: memref<1x128xf32, #tpu.memory_space<vmem>>, %arg9: memref<256x128xf32, #tpu.memory_space<vmem>>, %arg10: memref<512x128xbf16, #tpu.memory_space<vmem>>, %arg11: memref<512x128xbf16, #tpu.memory_space<vmem>>, %arg12: memref<256x128xf32, #tpu.memory_space<vmem>>) attributes {dimension_semantics = [#tpu.dimension_semantics<arbitrary>, #tpu.dimension_semantics<arbitrary>, #tpu.dimension_semantics<arbitrary>], iteration_bounds = array<i64: 2, 2, 2>, scalar_prefetch = 0 : i64, scratch_operands = 3 : i64, tpu.core_type = #tpu.core_type<tc>, window_params = [{transform_indices = @transform_0, window_bounds = array<i64: 256, 256>}, {pipeline_mode = #tpu.pipeline_mode<synchronous>, transform_indices = @transform_1, window_bounds = array<i64: 512, 128>}, {pipeline_mode = #tpu.pipeline_mode<synchronous>, transform_indices = @transform_2, window_bounds = array<i64: 128, 128>}, {pipeline_mode = #tpu.pipeline_mode<synchronous>, transform_indices = @transform_3, window_bounds = array<i64: 1, 128>}, {pipeline_mode = #tpu.pipeline_mode<synchronous>, transform_indices = @transform_4, window_bounds = array<i64: 128, 128>}, {pipeline_mode = #tpu.pipeline_mode<synchronous>, transform_indices = @transform_5, window_bounds = array<i64: 1, 128>}, {transform_indices = @transform_6, window_bounds = array<i64: 256, 128>}]} {
    %c0_i32 = arith.constant 0 : i32
    %0 = arith.cmpi eq, %arg0, %c0_i32 : i32
    %c0_i32_0 = arith.constant 0 : i32
    %1 = arith.cmpi eq, %arg1, %c0_i32_0 : i32
    %2 = arith.andi %0, %1 : i1
    %c0_i32_1 = arith.constant 0 : i32
    %3 = arith.cmpi eq, %arg2, %c0_i32_1 : i32
    %4 = arith.andi %2, %3 : i1
    %5 = arith.extui %4 : i1 to i32
    %c0_i32_2 = arith.constant 0 : i32
    %6 = arith.cmpi ne, %5, %c0_i32_2 : i32
    scf.if %6 {
      %c0_15 = arith.constant 0 : index
      %c0_16 = arith.constant 0 : index
      %29 = vector.load %arg4[%c0_15, %c0_16] : memref<512x128xbf16, #tpu.memory_space<vmem>>, vector<512x128xbf16>
      %c0_17 = arith.constant 0 : index
      %c0_18 = arith.constant 0 : index
      %30 = vector.load %arg5[%c0_17, %c0_18] : memref<128x128xbf16, #tpu.memory_space<vmem>>, vector<128x128xbf16>
      %cst = arith.constant dense<0.000000e+00> : vector<512x128xf32>
      %31 = tpu.matmul %29, %30, %cst {dimension_numbers = #tpu.dot_dimension_numbers<[1], [0], [0], [1], [0, 0, 1, 1], [], []>} : vector<512x128xbf16>, vector<128x128xbf16>, vector<512x128xf32> -> vector<512x128xf32>
      %32 = arith.truncf %31 : vector<512x128xf32> to vector<512x128xbf16>
      %c0_19 = arith.constant 0 : index
      %c0_20 = arith.constant 0 : index
      %33 = vector.load %arg10[%c0_19, %c0_20] : memref<512x128xbf16, #tpu.memory_space<vmem>>, vector<512x128xbf16>
      tpu.vector_store %arg10[%c0_19, %c0_20], %32 {strides = array<i32>} : memref<512x128xbf16, #tpu.memory_space<vmem>>, vector<512x128xbf16>,
    } else {
    }
    %c0_i32_3 = arith.constant 0 : i32
    %7 = arith.cmpi eq, %arg2, %c0_i32_3 : i32
    %8 = arith.extui %7 : i1 to i32
    %c0_i32_4 = arith.constant 0 : i32
    %9 = arith.cmpi ne, %8, %c0_i32_4 : i32
    scf.if %9 {
      %cst = arith.constant 0.000000e+00 : f32
      %29 = vector.broadcast %cst : f32 to vector<256x128xf32>
      %c0_15 = arith.constant 0 : index
      %c0_16 = arith.constant 0 : index
      %30 = vector.load %arg12[%c0_15, %c0_16] : memref<256x128xf32, #tpu.memory_space<vmem>>, vector<256x128xf32>
      tpu.vector_store %arg12[%c0_15, %c0_16], %29 {strides = array<i32>} : memref<256x128xf32, #tpu.memory_space<vmem>>, vector<256x128xf32>,
    } else {
    }
    %c0 = arith.constant 0 : index
    %c0_5 = arith.constant 0 : index
    %10 = vector.load %arg3[%c0, %c0_5] : memref<256x256xbf16, #tpu.memory_space<vmem>>, vector<256x256xbf16>
    %c256_i32 = arith.constant 256 : i32
    %11 = arith.muli %arg2, %c256_i32 : i32
    %12 = tpu.assume_multiple %11, 256 : i32
    %c0_i32_6 = arith.constant 0 : i32
    %13 = arith.cmpi eq, %arg0, %c0_i32_6 : i32
    %14 = arith.extui %13 : i1 to i32
    %c0_i32_7 = arith.constant 0 : i32
    %15 = arith.cmpi ne, %14, %c0_i32_7 : i32
    scf.if %15 {
      %c0_15 = arith.constant 0 : index
      %c0_16 = arith.constant 0 : index
      %29 = vector.load %arg12[%c0_15, %c0_16] : memref<256x128xf32, #tpu.memory_space<vmem>>, vector<256x128xf32>
      %30 = arith.index_cast %12 : i32 to index
      %c0_17 = arith.constant 0 : index
      %31 = vector.load %arg10[%30, %c0_17] : memref<512x128xbf16, #tpu.memory_space<vmem>>, vector<256x128xbf16>
      %cst = arith.constant dense<0.000000e+00> : vector<256x128xf32>
      %32 = tpu.matmul %10, %31, %cst {dimension_numbers = #tpu.dot_dimension_numbers<[1], [0], [0], [1], [0, 0, 1, 1], [], []>} : vector<256x256xbf16>, vector<256x128xbf16>, vector<256x128xf32> -> vector<256x128xf32>
      %33 = arith.addf %29, %32 : vector<256x128xf32>
      %c0_18 = arith.constant 0 : index
      %c0_19 = arith.constant 0 : index
      %34 = vector.load %arg12[%c0_18, %c0_19] : memref<256x128xf32, #tpu.memory_space<vmem>>, vector<256x128xf32>
      tpu.vector_store %arg12[%c0_18, %c0_19], %33 {strides = array<i32>} : memref<256x128xf32, #tpu.memory_space<vmem>>, vector<256x128xf32>,
    } else {
    }
    %c1_i32 = arith.constant 1 : i32
    %16 = arith.cmpi eq, %arg0, %c1_i32 : i32
    %17 = arith.extui %16 : i1 to i32
    %c0_i32_8 = arith.constant 0 : i32
    %18 = arith.cmpi ne, %17, %c0_i32_8 : i32
    scf.if %18 {
      %c0_15 = arith.constant 0 : index
      %c0_16 = arith.constant 0 : index
      %29 = vector.load %arg12[%c0_15, %c0_16] : memref<256x128xf32, #tpu.memory_space<vmem>>, vector<256x128xf32>
      %30 = arith.index_cast %12 : i32 to index
      %c0_17 = arith.constant 0 : index
      %31 = vector.load %arg11[%30, %c0_17] : memref<512x128xbf16, #tpu.memory_space<vmem>>, vector<256x128xbf16>
      %cst = arith.constant dense<0.000000e+00> : vector<256x128xf32>
      %32 = tpu.matmul %10, %31, %cst {dimension_numbers = #tpu.dot_dimension_numbers<[1], [0], [0], [1], [0, 0, 1, 1], [], []>} : vector<256x256xbf16>, vector<256x128xbf16>, vector<256x128xf32> -> vector<256x128xf32>
      %33 = arith.addf %29, %32 : vector<256x128xf32>
      %c0_18 = arith.constant 0 : index
      %c0_19 = arith.constant 0 : index
      %34 = vector.load %arg12[%c0_18, %c0_19] : memref<256x128xf32, #tpu.memory_space<vmem>>, vector<256x128xf32>
      tpu.vector_store %arg12[%c0_18, %c0_19], %33 {strides = array<i32>} : memref<256x128xf32, #tpu.memory_space<vmem>>, vector<256x128xf32>,
    } else {
    }
    %c0_i32_9 = arith.constant 0 : i32
    %19 = arith.cmpi eq, %arg0, %c0_i32_9 : i32
    %c1_i32_10 = arith.constant 1 : i32
    %20 = arith.cmpi eq, %arg2, %c1_i32_10 : i32
    %21 = arith.andi %19, %20 : i1
    %22 = arith.extui %21 : i1 to i32
    %c0_i32_11 = arith.constant 0 : i32
    %23 = arith.cmpi ne, %22, %c0_i32_11 : i32
    scf.if %23 {
      %c0_15 = arith.constant 0 : index
      %c0_16 = arith.constant 0 : index
      %29 = vector.load %arg12[%c0_15, %c0_16] : memref<256x128xf32, #tpu.memory_space<vmem>>, vector<256x128xf32>
      %c0_17 = arith.constant 0 : index
      %c0_18 = arith.constant 0 : index
      %30 = vector.load %arg6[%c0_17, %c0_18] : memref<1x128xf32, #tpu.memory_space<vmem>>, vector<1x128xf32>
      %31 = vector.broadcast %30 : vector<1x128xf32> to vector<256x128xf32>
      %32 = arith.addf %29, %31 : vector<256x128xf32>
      %cst = arith.constant 0.000000e+00 : f32
      %33 = vector.broadcast %cst : f32 to vector<256x128xf32>
      %34 = arith.maximumf %32, %33 : vector<256x128xf32>
      %c256_i32_19 = arith.constant 256 : i32
      %35 = arith.muli %arg1, %c256_i32_19 : i32
      %36 = tpu.assume_multiple %35, 256 : i32
      %37 = arith.truncf %34 : vector<256x128xf32> to vector<256x128xbf16>
      %c0_20 = arith.constant 0 : index
      %c0_21 = arith.constant 0 : index
      %38 = vector.load %arg7[%c0_20, %c0_21] : memref<128x128xbf16, #tpu.memory_space<vmem>>, vector<128x128xbf16>
      %cst_22 = arith.constant dense<0.000000e+00> : vector<256x128xf32>
      %39 = tpu.matmul %37, %38, %cst_22 {dimension_numbers = #tpu.dot_dimension_numbers<[1], [0], [0], [1], [0, 0, 1, 1], [], []>} : vector<256x128xbf16>, vector<128x128xbf16>, vector<256x128xf32> -> vector<256x128xf32>
      %40 = arith.truncf %39 : vector<256x128xf32> to vector<256x128xbf16>
      %41 = arith.index_cast %36 : i32 to index
      %c0_23 = arith.constant 0 : index
      %42 = vector.load %arg11[%41, %c0_23] : memref<512x128xbf16, #tpu.memory_space<vmem>>, vector<256x128xbf16>
      tpu.vector_store %arg11[%41, %c0_23], %40 {strides = array<i32>} : memref<512x128xbf16, #tpu.memory_space<vmem>>, vector<256x128xbf16>,
    } else {
    }
    %c1_i32_12 = arith.constant 1 : i32
    %24 = arith.cmpi eq, %arg0, %c1_i32_12 : i32
    %c1_i32_13 = arith.constant 1 : i32
    %25 = arith.cmpi eq, %arg2, %c1_i32_13 : i32
    %26 = arith.andi %24, %25 : i1
    %27 = arith.extui %26 : i1 to i32
    %c0_i32_14 = arith.constant 0 : i32
    %28 = arith.cmpi ne, %27, %c0_i32_14 : i32
    scf.if %28 {
      %c0_15 = arith.constant 0 : index
      %c0_16 = arith.constant 0 : index
      %29 = vector.load %arg12[%c0_15, %c0_16] : memref<256x128xf32, #tpu.memory_space<vmem>>, vector<256x128xf32>
      %c0_17 = arith.constant 0 : index
      %c0_18 = arith.constant 0 : index
      %30 = vector.load %arg8[%c0_17, %c0_18] : memref<1x128xf32, #tpu.memory_space<vmem>>, vector<1x128xf32>
      %31 = vector.broadcast %30 : vector<1x128xf32> to vector<256x128xf32>
      %32 = arith.addf %29, %31 : vector<256x128xf32>
      %c0_19 = arith.constant 0 : index
      %c0_20 = arith.constant 0 : index
      %33 = vector.load %arg9[%c0_19, %c0_20] : memref<256x128xf32, #tpu.memory_space<vmem>>, vector<256x128xf32>
      tpu.vector_store %arg9[%c0_19, %c0_20], %32 {strides = array<i32>} : memref<256x128xf32, #tpu.memory_space<vmem>>, vector<256x128xf32>,
    } else {
    }
    return
  }
  func.func @transform_0(%arg0: i32, %arg1: i32, %arg2: i32) -> (i32, i32) {
    %c0_i32 = arith.constant 0 : i32
    return %arg1, %arg2 : i32, i32
  }
  func.func @transform_1(%arg0: i32, %arg1: i32, %arg2: i32) -> (i32, i32) {
    %c0_i32 = arith.constant 0 : i32
    %c0_i32_0 = arith.constant 0 : i32
    %c0_i32_1 = arith.constant 0 : i32
    return %c0_i32, %c0_i32_0 : i32, i32
  }
  func.func @transform_2(%arg0: i32, %arg1: i32, %arg2: i32) -> (i32, i32) {
    %c0_i32 = arith.constant 0 : i32
    %c0_i32_0 = arith.constant 0 : i32
    %c0_i32_1 = arith.constant 0 : i32
    return %c0_i32, %c0_i32_0 : i32, i32
  }
  func.func @transform_3(%arg0: i32, %arg1: i32, %arg2: i32) -> (i32, i32) {
    %c0_i32 = arith.constant 0 : i32
    %c0_i32_0 = arith.constant 0 : i32
    %c0_i32_1 = arith.constant 0 : i32
    return %c0_i32, %c0_i32_0 : i32, i32
  }
  func.func @transform_4(%arg0: i32, %arg1: i32, %arg2: i32) -> (i32, i32) {
    %c0_i32 = arith.constant 0 : i32
    %c0_i32_0 = arith.constant 0 : i32
    %c0_i32_1 = arith.constant 0 : i32
    return %c0_i32, %c0_i32_0 : i32, i32
  }
  func.func @transform_5(%arg0: i32, %arg1: i32, %arg2: i32) -> (i32, i32) {
    %c0_i32 = arith.constant 0 : i32
    %c0_i32_0 = arith.constant 0 : i32
    %c0_i32_1 = arith.constant 0 : i32
    return %c0_i32, %c0_i32_0 : i32, i32
  }
  func.func @transform_6(%arg0: i32, %arg1: i32, %arg2: i32) -> (i32, i32) {
    %0 = arith.muli %arg1, %arg0 : i32
    %c0_i32 = arith.constant 0 : i32
    %c0_i32_0 = arith.constant 0 : i32
    return %0, %c0_i32 : i32, i32
  }
}

</mosaic_0001>

<llo_original>
// kernel: tpu_custom_call.1
$region0: #{tpu_custom_call.1}
  #allocation0 [shape = 'u32[]', space=smem, size = 0x4, offset = 0x4, fixed_abs, tag = 'smem constant byte address 0x4 - core index']
  #allocation1 [shape = 'u32[144,128]{1,0:T(1,128)}', space=vmem, size = 0x12000, scoped, tag = 'internal scratch']
  #allocation2 [shape = 'bf16[512,128]{1,0:T(16,128)(2,1)}', space=vmem, size = 0x20000, scoped, tag = 'scratch operand']
  #allocation3 [shape = 'bf16[512,128]{1,0:T(16,128)(2,1)}', space=vmem, size = 0x20000, scoped, tag = 'scratch operand']
  #allocation4 [shape = 'f32[256,128]{1,0:T(8,128)}', space=vmem, size = 0x20000, scoped, tag = 'scratch operand']
  %s0 = inlined_call_operand.hbm [shape: bf16[512,512], index: 0, kind: input, shape index: {}]
  %s1 = inlined_call_operand.hbm [shape: bf16[512,128], index: 1, kind: input, shape index: {}]
  %s2 = inlined_call_operand.hbm [shape: bf16[128,128], index: 2, kind: input, shape index: {}]
  %s3 = inlined_call_operand.vmem [shape: f32[1,128], index: 3, kind: input, shape index: {}]
  %s4 = inlined_call_operand.hbm [shape: bf16[128,128], index: 4, kind: input, shape index: {}]
  %s5 = inlined_call_operand.vmem [shape: f32[1,128], index: 5, kind: input, shape index: {}]
  %s6 = inlined_call_operand.hbm [shape: f32[512,128], index: 6, kind: output, shape index: {}]
  %s7 = sld [smem:[#allocation0]]
  $region97: #{tpu_custom_call.1} parent=0
    _
  %s9 = ssub.s32 1, %s7
  %s10 = scalar_select 0, %s9, %s7
  $region1: #{tpu_custom_call.1} parent=0
    #allocation5 [shape = 'u8[262144]{0}', space=vmem, size = 0x40000, scoped, tag = 'input window, operand 0']
    #allocation6 [shape = 's32[2]{0}', space=sflag, size = 0x8, scoped, tag = 'scoped memory for tpu_custom_call.1']
    #allocation7 [shape = 's32[2]{0}', space=sflag, size = 0x8, scoped, tag = 'scoped memory for tpu_custom_call.1']
    #allocation8 [shape = 'u8[131072]{0}', space=vmem, size = 0x20000, scoped, tag = 'input window, operand 1, single buffered']
    #allocation9 [shape = 's32[1]{0}', space=sflag, size = 0x4, scoped, tag = 'scoped memory for tpu_custom_call.1']
    #allocation10 [shape = 'u8[32768]{0}', space=vmem, size = 0x8000, scoped, tag = 'input window, operand 2, single buffered']
    #allocation11 [shape = 'u8[32768]{0}', space=vmem, size = 0x8000, scoped, tag = 'input window, operand 4, single buffered']
    #allocation12 [shape = 's32[1]{0}', space=sflag, size = 0x4, scoped, tag = 'scoped memory for tpu_custom_call.1']
    #allocation13 [shape = 'u8[262144]{0}', space=vmem, size = 0x40000, scoped, tag = 'output window, operand 0']
    %11 = vsyncpa [#allocation6], 0
    %s12 = scalar_lea.sflag [#allocation6], 1
    %13 = vsyncpa %s12, 0
    %14 = vsyncpa [#allocation9], 0
    %15 = vsyncpa [#allocation12], 0
    %16 = vsyncpa [#allocation7], 0
    %s17 = scalar_lea.sflag [#allocation7], 1
    %18 = vsyncpa %s17, 0
    loop: start=0, step=1, limit=10
    $region2: #{tpu_custom_call.1} parent=1 // loop_pre_header
      _
    $region3: #{tpu_custom_call.1} parent=1 // loop_header
      %s20 = sphi 0, %s24
      %p21 = scmp.ge.s32.totalorder %s20, 10
      %s27 = sphi 0, %s46
      %s28 = sphi 0, %s42
      %s29 = sphi 0, %s38
      %s30 = sphi 0, %s27
      %s31 = sphi 0, %s28
      %s32 = sphi 0, %s29
      %s33 = sphi 0, %s30
      %s34 = sphi 0, %s31
      %s35 = sphi 0, %s32
      %s51 = sphi 0, %s53
      %s54 = sphi 0, %s51
      %s55 = sphi 0, %s54
      %s71 = sphi 0, %s55
      %s75 = sphi 0, %s75
      %s77 = sphi 0, %s75
      %s78 = sphi 0, %s77
      %s92 = sphi 0, %s78
      %s96 = sphi 0, %s96
      %s98 = sphi 0, %s96
      %s99 = sphi 0, %s98
      %s113 = sphi 0, %s99
      %s117 = sphi 0, %s117
      %s119 = sphi 0, %s117
      %s120 = sphi 0, %s119
      %s134 = sphi 0, %s120
      %s138 = sphi 0, %s138
      %s140 = sphi 0, %s138
      %s141 = sphi 0, %s140
      %s155 = sphi 0, %s141
      %s159 = sphi 0, %s159
      %s161 = sphi 0, %s159
      %s162 = sphi 0, %s161
      %s176 = sphi 0, %s162
      %s184 = sphi 0, %s186
      %s187 = sphi 0, %s184
      %s188 = sphi 0, %s187
      %s204 = sphi 0, %s188
    $region4: #{tpu_custom_call.1} parent=1 // loop_header_branch
      %23 = sbr.rel (%p21) target = $region8
    $region5: #{tpu_custom_call.1} parent=1 // loop_body
      %s25 = ssub.s32 %s20, 1
      %s26 = ssub.s32 %s20, 2
      %s36 = sadd.s32 1, %s29
      %p37 = scmp.ge.s32.totalorder %s36, 2
      %s38 = scalar_select %p37, 0, %s36
      %s39 = sadd.s32 1, %s28
      %s40 = scalar_select %p37, %s39, %s28
      %p41 = scmp.ge.s32.totalorder %s40, 2
      %s42 = scalar_select %p41, 0, %s40
      %s43 = sadd.s32 1, %s27
      %s44 = scalar_select %p41, %s43, %s27
      %p45 = scmp.ge.s32.totalorder %s44, 2
      %s46 = scalar_select %p45, 0, %s44
      %s47 = ssub.s32 %s28, %s42
      %s48 = ssub.s32 %s29, %s38
      %s49 = sor.u32 %s47, %s48
      %p50 = scmp.eq.s32.totalorder %s49, 0
      %s52 = sadd.s32 %s51, 1
      %s53 = scalar_select %p50, %s51, %s52
      %p56 = pneg %p50
      %p57 = scmp.eq.s32.totalorder %s20, 7
      %p58 = por %p56, %p57
      %p59 = scmp.ne.s32.totalorder %s51, %s54
      %p60 = scmp.eq.s32.totalorder %s20, 0
      %p61 = por %p59, %p60
      %p62 = scmp.ne.s32.totalorder %s51, %s54
      %p63 = scmp.eq.s32.totalorder %s25, 7
      %p64 = por %p62, %p63
      %p65 = scmp.ne.s32.totalorder %s54, %s55
      %p66 = scmp.eq.s32.totalorder %s25, 0
      %p67 = por %p65, %p66
      %p68 = scmp.ne.s32.totalorder %s54, %s55
      %p69 = scmp.eq.s32.totalorder %s26, 7
      %p70 = por %p68, %p69
      %p72 = scmp.ne.s32.totalorder %s55, %s71
      %p73 = scmp.eq.s32.totalorder %s26, 0
      %p74 = por %p72, %p73
      %s76 = sadd.s32 %s75, 1
      %p79 = scmp.eq.s32.totalorder %s20, 7
      %p80 = scmp.ne.s32.totalorder %s75, %s77
      %p81 = scmp.eq.s32.totalorder %s20, 0
      %p82 = por %p80, %p81
      %p83 = scmp.ne.s32.totalorder %s75, %s77
      %p84 = scmp.eq.s32.totalorder %s25, 7
      %p85 = por %p83, %p84
      %p86 = scmp.ne.s32.totalorder %s77, %s78
      %p87 = scmp.eq.s32.totalorder %s25, 0
      %p88 = por %p86, %p87
      %p89 = scmp.ne.s32.totalorder %s77, %s78
      %p90 = scmp.eq.s32.totalorder %s26, 7
      %p91 = por %p89, %p90
      %p93 = scmp.ne.s32.totalorder %s78, %s92
      %p94 = scmp.eq.s32.totalorder %s26, 0
      %p95 = por %p93, %p94
      %s97 = sadd.s32 %s96, 1
      %p100 = scmp.eq.s32.totalorder %s20, 7
      %p101 = scmp.ne.s32.totalorder %s96, %s98
      %p102 = scmp.eq.s32.totalorder %s20, 0
      %p103 = por %p101, %p102
      %p104 = scmp.ne.s32.totalorder %s96, %s98
      %p105 = scmp.eq.s32.totalorder %s25, 7
      %p106 = por %p104, %p105
      %p107 = scmp.ne.s32.totalorder %s98, %s99
      %p108 = scmp.eq.s32.totalorder %s25, 0
      %p109 = por %p107, %p108
      %p110 = scmp.ne.s32.totalorder %s98, %s99
      %p111 = scmp.eq.s32.totalorder %s26, 7
      %p112 = por %p110, %p111
      %p114 = scmp.ne.s32.totalorder %s99, %s113
      %p115 = scmp.eq.s32.totalorder %s26, 0
      %p116 = por %p114, %p115
      %s118 = sadd.s32 %s117, 1
      %p121 = scmp.eq.s32.totalorder %s20, 7
      %p122 = scmp.ne.s32.totalorder %s117, %s119
      %p123 = scmp.eq.s32.totalorder %s20, 0
      %p124 = por %p122, %p123
      %p125 = scmp.ne.s32.totalorder %s117, %s119
      %p126 = scmp.eq.s32.totalorder %s25, 7
      %p127 = por %p125, %p126
      %p128 = scmp.ne.s32.totalorder %s119, %s120
      %p129 = scmp.eq.s32.totalorder %s25, 0
      %p130 = por %p128, %p129
      %p131 = scmp.ne.s32.totalorder %s119, %s120
      %p132 = scmp.eq.s32.totalorder %s26, 7
      %p133 = por %p131, %p132
      %p135 = scmp.ne.s32.totalorder %s120, %s134
      %p136 = scmp.eq.s32.totalorder %s26, 0
      %p137 = por %p135, %p136
      %s139 = sadd.s32 %s138, 1
      %p142 = scmp.eq.s32.totalorder %s20, 7
      %p143 = scmp.ne.s32.totalorder %s138, %s140
      %p144 = scmp.eq.s32.totalorder %s20, 0
      %p145 = por %p143, %p144
      %p146 = scmp.ne.s32.totalorder %s138, %s140
      %p147 = scmp.eq.s32.totalorder %s25, 7
      %p148 = por %p146, %p147
      %p149 = scmp.ne.s32.totalorder %s140, %s141
      %p150 = scmp.eq.s32.totalorder %s25, 0
      %p151 = por %p149, %p150
      %p152 = scmp.ne.s32.totalorder %s140, %s141
      %p153 = scmp.eq.s32.totalorder %s26, 7
      %p154 = por %p152, %p153
      %p156 = scmp.ne.s32.totalorder %s141, %s155
      %p157 = scmp.eq.s32.totalorder %s26, 0
      %p158 = por %p156, %p157
      %s160 = sadd.s32 %s159, 1
      %p163 = scmp.eq.s32.totalorder %s20, 7
      %p164 = scmp.ne.s32.totalorder %s159, %s161
      %p165 = scmp.eq.s32.totalorder %s20, 0
      %p166 = por %p164, %p165
      %p167 = scmp.ne.s32.totalorder %s159, %s161
      %p168 = scmp.eq.s32.totalorder %s25, 7
      %p169 = por %p167, %p168
      %p170 = scmp.ne.s32.totalorder %s161, %s162
      %p171 = scmp.eq.s32.totalorder %s25, 0
      %p172 = por %p170, %p171
      %p173 = scmp.ne.s32.totalorder %s161, %s162
      %p174 = scmp.eq.s32.totalorder %s26, 7
      %p175 = por %p173, %p174
      %p177 = scmp.ne.s32.totalorder %s162, %s176
      %p178 = scmp.eq.s32.totalorder %s26, 0
      %p179 = por %p177, %p178
      %s180 = smul.u32 %s28, %s27
      %s181 = smul.u32 %s42, %s46
      %s182 = ssub.s32 %s180, %s181
      %p183 = scmp.eq.s32.totalorder %s182, 0
      %s185 = sadd.s32 %s184, 1
      %s186 = scalar_select %p183, %s184, %s185
      %p189 = pneg %p183
      %p190 = scmp.eq.s32.totalorder %s20, 7
      %p191 = por %p189, %p190
      %p192 = scmp.ne.s32.totalorder %s184, %s187
      %p193 = scmp.eq.s32.totalorder %s20, 0
      %p194 = por %p192, %p193
      %p195 = scmp.ne.s32.totalorder %s184, %s187
      %p196 = scmp.eq.s32.totalorder %s25, 7
      %p197 = por %p195, %p196
      %p198 = scmp.ne.s32.totalorder %s187, %s188
      %p199 = scmp.eq.s32.totalorder %s25, 0
      %p200 = por %p198, %p199
      %p201 = scmp.ne.s32.totalorder %s187, %s188
      %p202 = scmp.eq.s32.totalorder %s26, 7
      %p203 = por %p201, %p202
      %p205 = scmp.ne.s32.totalorder %s188, %s204
      %p206 = scmp.eq.s32.totalorder %s26, 0
      %p207 = por %p205, %p206
      %p208 = scmp.le.s32.totalorder 1, %s20
      %p209 = scmp.lt.s32.totalorder %s20, 9
      %p210 = pnand %p208, %p209
      %p211 = pneg %p210
      // Predicated region
      $region9: #{tpu_custom_call.1} parent=5 // pred_check
        _
      $region10: #{tpu_custom_call.1} parent=5 // pred_check_branch
        %213 = sbr.rel (%p210) target = $region12
      $region11: #{tpu_custom_call.1} parent=5 // pred_region
        %s214 = ssub.s32 %s20, 1
        // Predicated region
        $region13: #{tpu_custom_call.1} parent=11 // pred_check
          %p215 = pneg %p88
        $region14: #{tpu_custom_call.1} parent=11 // pred_check_branch
          %217 = sbr.rel (%p215) target = $region16
        $region15: #{tpu_custom_call.1} parent=11 // pred_region
          %s219 = ssub.s32 4096, 4096
          %220 = vsyncadd [#allocation9], %s219
          %s221 = sshll.u32 [#allocation8], 4
          %s222 = int_to_ptr.vmem [resolvable:$true] %s221
          %227 = dma.hbm_to_vmem [thread:$0]  %s1, 4096, %s222, [#allocation9], 64, 64, 4
        $region16: #{tpu_custom_call.1} parent=11 // pred_fallthru
          _
        // Predicated region
        $region17: #{tpu_custom_call.1} parent=11 // pred_check
          %p228 = pneg %p109
        $region18: #{tpu_custom_call.1} parent=11 // pred_check_branch
          %230 = sbr.rel (%p228) target = $region20
        $region19: #{tpu_custom_call.1} parent=11 // pred_region
          %s232 = ssub.s32 1024, 1024
          %233 = vsyncadd [#allocation9], %s232
          %s234 = sshll.u32 [#allocation10], 4
          %s235 = int_to_ptr.vmem [resolvable:$true] %s234
          %240 = dma.hbm_to_vmem [thread:$0]  %s2, 1024, %s235, [#allocation9], 64, 64, 4
        $region20: #{tpu_custom_call.1} parent=11 // pred_fallthru
          _
        // Predicated region
        $region21: #{tpu_custom_call.1} parent=11 // pred_check
          %p241 = pneg %p130
        $region22: #{tpu_custom_call.1} parent=11 // pred_check_branch
          %243 = sbr.rel (%p241) target = $region24
        $region23: #{tpu_custom_call.1} parent=11 // pred_region
          _
        $region24: #{tpu_custom_call.1} parent=11 // pred_fallthru
          _
        // Predicated region
        $region25: #{tpu_custom_call.1} parent=11 // pred_check
          %p244 = pneg %p151
        $region26: #{tpu_custom_call.1} parent=11 // pred_check_branch
          %246 = sbr.rel (%p244) target = $region28
        $region27: #{tpu_custom_call.1} parent=11 // pred_region
          %s248 = ssub.s32 1024, 1024
          %249 = vsyncadd [#allocation12], %s248
          %s250 = sshll.u32 [#allocation11], 4
          %s251 = int_to_ptr.vmem [resolvable:$true] %s250
          %256 = dma.hbm_to_vmem [thread:$0]  %s4, 1024, %s251, [#allocation12], 64, 64, 4
        $region28: #{tpu_custom_call.1} parent=11 // pred_fallthru
          _
        // Predicated region
        $region29: #{tpu_custom_call.1} parent=11 // pred_check
          %p257 = pneg %p172
        $region30: #{tpu_custom_call.1} parent=11 // pred_check_branch
          %259 = sbr.rel (%p257) target = $region32
        $region31: #{tpu_custom_call.1} parent=11 // pred_region
          _
        $region32: #{tpu_custom_call.1} parent=11 // pred_fallthru
          _
      $region12: #{tpu_custom_call.1} parent=5 // pred_fallthru
        _
      %p260 = scmp.lt.s32.totalorder %s20, 8
      // Predicated region
      $region33: #{tpu_custom_call.1} parent=5 // pred_check
        %p261 = pneg %p260
      $region34: #{tpu_custom_call.1} parent=5 // pred_check_branch
        %263 = sbr.rel (%p261) target = $region36
      $region35: #{tpu_custom_call.1} parent=5 // pred_region
        // Predicated region
        $region37: #{tpu_custom_call.1} parent=35 // pred_check
          %p264 = pneg %p61
        $region38: #{tpu_custom_call.1} parent=35 // pred_check_branch
          %266 = sbr.rel (%p264) target = $region40
        $region39: #{tpu_custom_call.1} parent=35 // pred_region
          %s267 = sand.u32 %s51, 1
          %s268 = scalar_lea.sflag [#allocation6], %s267
          %s269 = sand.u32 %s51, 1
          %s270 = smul.addr %s269, 256
          %s271 = scalar_lea.vmem [#allocation5], %s270
          %s272 = smul.u32 32, %s28
          %s273 = smul.u32 2, %s29
          %s275 = ssub.s32 4096, 4096
          %276 = vsyncadd %s268, %s275
          %s277 = smul.addr %s272, 4
          %s278 = sadd.s32 %s273, %s277
          %s279 = smul.addr %s278, 64
          %s280 = scalar_lea.hbm %s0, %s279
          %s281 = sshll.u32 %s271, 4
          %s282 = int_to_ptr.vmem [resolvable:$true] %s281
          %287 = dma.hbm_to_vmem [thread:$0]  %s280, 4096, %s282, %s268, 256, 128, 8
        $region40: #{tpu_custom_call.1} parent=35 // pred_fallthru
          _
      $region36: #{tpu_custom_call.1} parent=5 // pred_fallthru
        _
      %p288 = scmp.le.s32.totalorder 1, %s20
      %p289 = scmp.lt.s32.totalorder %s20, 9
      %p290 = pnand %p288, %p289
      %p291 = pneg %p290
      // Predicated region
      $region41: #{tpu_custom_call.1} parent=5 // pred_check
        _
      $region42: #{tpu_custom_call.1} parent=5 // pred_check_branch
        %293 = sbr.rel (%p290) target = $region44
      $region43: #{tpu_custom_call.1} parent=5 // pred_region
        %s294 = ssub.s32 %s20, 1
        %s295 = sand.u32 %s54, 1
        %s296 = scalar_lea.sflag [#allocation6], %s295
        %s297 = sand.u32 %s54, 1
        %s298 = smul.addr %s297, 256
        %s299 = scalar_lea.vmem [#allocation5], %s298
        // Predicated region
        $region45: #{tpu_custom_call.1} parent=43 // pred_check
          %p300 = pneg %p67
        $region46: #{tpu_custom_call.1} parent=43 // pred_check_branch
          %302 = sbr.rel (%p300) target = $region48
        $region47: #{tpu_custom_call.1} parent=43 // pred_region
          %303 = dma.done %s296, 4096
        $region48: #{tpu_custom_call.1} parent=43 // pred_fallthru
          _
        // Predicated region
        $region49: #{tpu_custom_call.1} parent=43 // pred_check
          %p304 = pneg %p88
        $region50: #{tpu_custom_call.1} parent=43 // pred_check_branch
          %306 = sbr.rel (%p304) target = $region52
        $region51: #{tpu_custom_call.1} parent=43 // pred_region
          %307 = dma.done [#allocation9], 4096
        $region52: #{tpu_custom_call.1} parent=43 // pred_fallthru
          _
        // Predicated region
        $region53: #{tpu_custom_call.1} parent=43 // pred_check
          %p308 = pneg %p109
        $region54: #{tpu_custom_call.1} parent=43 // pred_check_branch
          %310 = sbr.rel (%p308) target = $region56
        $region55: #{tpu_custom_call.1} parent=43 // pred_region
          %311 = dma.done [#allocation9], 1024
        $region56: #{tpu_custom_call.1} parent=43 // pred_fallthru
          _
        // Predicated region
        $region57: #{tpu_custom_call.1} parent=43 // pred_check
          %p312 = pneg %p151
        $region58: #{tpu_custom_call.1} parent=43 // pred_check_branch
          %314 = sbr.rel (%p312) target = $region60
        $region59: #{tpu_custom_call.1} parent=43 // pred_region
          %315 = dma.done [#allocation12], 1024
        $region60: #{tpu_custom_call.1} parent=43 // pred_fallthru
          _
        %s316 = sand.u32 %s54, 1
        %s317 = scalar_lea.sflag [#allocation6], %s316
        %s318 = sand.u32 %s54, 1
        %s319 = smul.addr %s318, 256
        %s320 = scalar_lea.vmem [#allocation5], %s319
        %p321 = pneg %p67
        %p322 = pneg %p64
        %p323 = pneg %p88
        %p324 = pneg %p85
        %p325 = pneg %p109
        %p326 = pneg %p106
        %p327 = pneg %p130
        %p328 = pneg %p127
        %p329 = pneg %p151
        %p330 = pneg %p148
        %p331 = pneg %p172
        %p332 = pneg %p169
        %p333 = pneg %p200
        %p334 = pneg %p197
        %s335 = sand.u32 %s187, 1
        %s336 = scalar_lea.sflag [#allocation7], %s335
        %s337 = sand.u32 %s187, 1
        %s338 = smul.addr %s337, 256
        %s339 = scalar_lea.vmem [#allocation13], %s338
        %s340 = smul.u32 32, %s31
        %s341 = smul.u32 2, %s32
        %s342 = smul.u32 %s31, %s30
        %s343 = smul.u32 32, %s342
        %p345 = scmp.eq.s32.totalorder %s30, 0
        %p346 = scmp.eq.s32.totalorder %s31, 0
        %p347 = pnand %p345, %p346
        %p348 = pneg %p347
        %p349 = scmp.eq.s32.totalorder %s32, 0
        %p350 = pnand %p348, %p349
        %p351 = pneg %p350
        // Predicated region
        $region61: #{tpu_custom_call.1} parent=43 // pred_check
          _
        $region62: #{tpu_custom_call.1} parent=43 // pred_check_branch
          %353 = sbr.rel (%p350) target = $region64
        $region63: #{tpu_custom_call.1} parent=43 // pred_region
          %v354 = vld [vmem:[#allocation8] sm:$0xf]
          %v355 = vld [vmem:[#allocation8 + $0x4] sm:$0xf]
          %v356 = vld [vmem:[#allocation8 + $0x8] sm:$0xf]
          %v357 = vld [vmem:[#allocation8 + $0xc] sm:$0xf]
          %v358 = vld [vmem:[#allocation8 + $0x10] sm:$0xf]
          %v359 = vld [vmem:[#allocation8 + $0x14] sm:$0xf]
          %v360 = vld [vmem:[#allocation8 + $0x18] sm:$0xf]
          %v361 = vld [vmem:[#allocation8 + $0x1c] sm:$0xf]
          %v362 = vld [vmem:[#allocation8 + $0x20] sm:$0xf]
          %v363 = vld [vmem:[#allocation8 + $0x24] sm:$0xf]
          %v364 = vld [vmem:[#allocation8 + $0x28] sm:$0xf]
          %v365 = vld [vmem:[#allocation8 + $0x2c] sm:$0xf]
          %v366 = vld [vmem:[#allocation8 + $0x30] sm:$0xf]
          %v367 = vld [vmem:[#allocation8 + $0x34] sm:$0xf]
          %v368 = vld [vmem:[#allocation8 + $0x38] sm:$0xf]
          %v369 = vld [vmem:[#allocation8 + $0x3c] sm:$0xf]
          %v370 = vld [vmem:[#allocation8 + $0x40] sm:$0xf]
          %v371 = vld [vmem:[#allocation8 + $0x44] sm:$0xf]
          %v372 = vld [vmem:[#allocation8 + $0x48] sm:$0xf]
          %v373 = vld [vmem:[#allocation8 + $0x4c] sm:$0xf]
          %v374 = vld [vmem:[#allocation8 + $0x50] sm:$0xf]
          %v375 = vld [vmem:[#allocation8 + $0x54] sm:$0xf]
          %v376 = vld [vmem:[#allocation8 + $0x58] sm:$0xf]
          %v377 = vld [vmem:[#allocation8 + $0x5c] sm:$0xf]
          %v378 = vld [vmem:[#allocation8 + $0x60] sm:$0xf]
          %v379 = vld [vmem:[#allocation8 + $0x64] sm:$0xf]
          %v380 = vld [vmem:[#allocation8 + $0x68] sm:$0xf]
          %v381 = vld [vmem:[#allocation8 + $0x6c] sm:$0xf]
          %v382 = vld [vmem:[#allocation8 + $0x70] sm:$0xf]
          %v383 = vld [vmem:[#allocation8 + $0x74] sm:$0xf]
          %v384 = vld [vmem:[#allocation8 + $0x78] sm:$0xf]
          %v385 = vld [vmem:[#allocation8 + $0x7c] sm:$0xf]
          %v386 = vld [vmem:[#allocation8 + $0x80] sm:$0xf]
          %v387 = vld [vmem:[#allocation8 + $0x84] sm:$0xf]
          %v388 = vld [vmem:[#allocation8 + $0x88] sm:$0xf]
          %v389 = vld [vmem:[#allocation8 + $0x8c] sm:$0xf]
          %v390 = vld [vmem:[#allocation8 + $0x90] sm:$0xf]
          %v391 = vld [vmem:[#allocation8 + $0x94] sm:$0xf]
          %v392 = vld [vmem:[#allocation8 + $0x98] sm:$0xf]
          %v393 = vld [vmem:[#allocation8 + $0x9c] sm:$0xf]
          %v394 = vld [vmem:[#allocation8 + $0xa0] sm:$0xf]
          %v395 = vld [vmem:[#allocation8 + $0xa4] sm:$0xf]
          %v396 = vld [vmem:[#allocation8 + $0xa8] sm:$0xf]
          %v397 = vld [vmem:[#allocation8 + $0xac] sm:$0xf]
          %v398 = vld [vmem:[#allocation8 + $0xb0] sm:$0xf]
          %v399 = vld [vmem:[#allocation8 + $0xb4] sm:$0xf]
          %v400 = vld [vmem:[#allocation8 + $0xb8] sm:$0xf]
          %v401 = vld [vmem:[#allocation8 + $0xbc] sm:$0xf]
          %v402 = vld [vmem:[#allocation8 + $0xc0] sm:$0xf]
          %v403 = vld [vmem:[#allocation8 + $0xc4] sm:$0xf]
          %v404 = vld [vmem:[#allocation8 + $0xc8] sm:$0xf]
          %v405 = vld [vmem:[#allocation8 + $0xcc] sm:$0xf]
          %v406 = vld [vmem:[#allocation8 + $0xd0] sm:$0xf]
          %v407 = vld [vmem:[#allocation8 + $0xd4] sm:$0xf]
          %v408 = vld [vmem:[#allocation8 + $0xd8] sm:$0xf]
          %v409 = vld [vmem:[#allocation8 + $0xdc] sm:$0xf]
          %v410 = vld [vmem:[#allocation8 + $0xe0] sm:$0xf]
          %v411 = vld [vmem:[#allocation8 + $0xe4] sm:$0xf]
          %v412 = vld [vmem:[#allocation8 + $0xe8] sm:$0xf]
          %v413 = vld [vmem:[#allocation8 + $0xec] sm:$0xf]
          %v414 = vld [vmem:[#allocation8 + $0xf0] sm:$0xf]
          %v415 = vld [vmem:[#allocation8 + $0xf4] sm:$0xf]
          %v416 = vld [vmem:[#allocation8 + $0xf8] sm:$0xf]
          %v417 = vld [vmem:[#allocation8 + $0xfc] sm:$0xf]
          %v418 = vld [vmem:[#allocation10] sm:$0xf]
          %v419 = vld [vmem:[#allocation10 + $0x4] sm:$0xf]
          %v420 = vld [vmem:[#allocation10 + $0x8] sm:$0xf]
          %v421 = vld [vmem:[#allocation10 + $0xc] sm:$0xf]
          %v422 = vld [vmem:[#allocation10 + $0x10] sm:$0xf]
          %v423 = vld [vmem:[#allocation10 + $0x14] sm:$0xf]
          %v424 = vld [vmem:[#allocation10 + $0x18] sm:$0xf]
          %v425 = vld [vmem:[#allocation10 + $0x1c] sm:$0xf]
          %v426 = vld [vmem:[#allocation10 + $0x20] sm:$0xf]
          %v427 = vld [vmem:[#allocation10 + $0x24] sm:$0xf]
          %v428 = vld [vmem:[#allocation10 + $0x28] sm:$0xf]
          %v429 = vld [vmem:[#allocation10 + $0x2c] sm:$0xf]
          %v430 = vld [vmem:[#allocation10 + $0x30] sm:$0xf]
          %v431 = vld [vmem:[#allocation10 + $0x34] sm:$0xf]
          %v432 = vld [vmem:[#allocation10 + $0x38] sm:$0xf]
          %v433 = vld [vmem:[#allocation10 + $0x3c] sm:$0xf]
          %v498 = vunpack.c.l.b16 %v354
          %v499 = vunpack.c.l.b16 %v355
          %v500 = vunpack.c.l.b16 %v356
          %v501 = vunpack.c.l.b16 %v357
          %v502 = vunpack.c.l.b16 %v358
          %v503 = vunpack.c.l.b16 %v359
          %v504 = vunpack.c.l.b16 %v360
          %v505 = vunpack.c.l.b16 %v361
          %v506 = vunpack.c.l.b16 %v362
          %v507 = vunpack.c.l.b16 %v363
          %v508 = vunpack.c.l.b16 %v364
          %v509 = vunpack.c.l.b16 %v365
          %v510 = vunpack.c.l.b16 %v366
          %v511 = vunpack.c.l.b16 %v367
          %v512 = vunpack.c.l.b16 %v368
          %v513 = vunpack.c.l.b16 %v369
          %v514 = vunpack.c.l.b16 %v370
          %v515 = vunpack.c.l.b16 %v371
          %v516 = vunpack.c.l.b16 %v372
          %v517 = vunpack.c.l.b16 %v373
          %v518 = vunpack.c.l.b16 %v374
          %v519 = vunpack.c.l.b16 %v375
          %v520 = vunpack.c.l.b16 %v376
          %v521 = vunpack.c.l.b16 %v377
          %v522 = vunpack.c.l.b16 %v378
          %v523 = vunpack.c.l.b16 %v379
          %v524 = vunpack.c.l.b16 %v380
          %v525 = vunpack.c.l.b16 %v381
          %v526 = vunpack.c.l.b16 %v382
          %v527 = vunpack.c.l.b16 %v383
          %v528 = vunpack.c.l.b16 %v384
          %v529 = vunpack.c.l.b16 %v385
          %v530 = vunpack.c.l.b16 %v386
          %v531 = vunpack.c.l.b16 %v387
          %v532 = vunpack.c.l.b16 %v388
          %v533 = vunpack.c.l.b16 %v389
          %v534 = vunpack.c.l.b16 %v390
          %v535 = vunpack.c.l.b16 %v391
          %v536 = vunpack.c.l.b16 %v392
          %v537 = vunpack.c.l.b16 %v393
          %v538 = vunpack.c.l.b16 %v394
          %v539 = vunpack.c.l.b16 %v395
          %v540 = vunpack.c.l.b16 %v396
          %v541 = vunpack.c.l.b16 %v397
          %v542 = vunpack.c.l.b16 %v398
          %v543 = vunpack.c.l.b16 %v399
          %v544 = vunpack.c.l.b16 %v400
          %v545 = vunpack.c.l.b16 %v401
          %v546 = vunpack.c.l.b16 %v402
          %v547 = vunpack.c.l.b16 %v403
          %v548 = vunpack.c.l.b16 %v404
          %v549 = vunpack.c.l.b16 %v405
          %v550 = vunpack.c.l.b16 %v406
          %v551 = vunpack.c.l.b16 %v407
          %v552 = vunpack.c.l.b16 %v408
          %v553 = vunpack.c.l.b16 %v409
          %v554 = vunpack.c.l.b16 %v410
          %v555 = vunpack.c.l.b16 %v411
          %v556 = vunpack.c.l.b16 %v412
          %v557 = vunpack.c.l.b16 %v413
          %v558 = vunpack.c.l.b16 %v414
          %v559 = vunpack.c.l.b16 %v415
          %v560 = vunpack.c.l.b16 %v416
          %v561 = vunpack.c.l.b16 %v417
          %v562 = vpack.c.b16 %v499, %v498
          %v563 = vpack.c.b16 %v501, %v500
          %v564 = vpack.c.b16 %v503, %v502
          %v565 = vpack.c.b16 %v505, %v504
          %v566 = vpack.c.b16 %v507, %v506
          %v567 = vpack.c.b16 %v509, %v508
          %v568 = vpack.c.b16 %v511, %v510
          %v569 = vpack.c.b16 %v513, %v512
          %v570 = vpack.c.b16 %v515, %v514
          %v571 = vpack.c.b16 %v517, %v516
          %v572 = vpack.c.b16 %v519, %v518
          %v573 = vpack.c.b16 %v521, %v520
          %v574 = vpack.c.b16 %v523, %v522
          %v575 = vpack.c.b16 %v525, %v524
          %v576 = vpack.c.b16 %v527, %v526
          %v577 = vpack.c.b16 %v529, %v528
          %v578 = vpack.c.b16 %v531, %v530
          %v579 = vpack.c.b16 %v533, %v532
          %v580 = vpack.c.b16 %v535, %v534
          %v581 = vpack.c.b16 %v537, %v536
          %v582 = vpack.c.b16 %v539, %v538
          %v583 = vpack.c.b16 %v541, %v540
          %v584 = vpack.c.b16 %v543, %v542
          %v585 = vpack.c.b16 %v545, %v544
          %v586 = vpack.c.b16 %v547, %v546
          %v587 = vpack.c.b16 %v549, %v548
          %v588 = vpack.c.b16 %v551, %v550
          %v589 = vpack.c.b16 %v553, %v552
          %v590 = vpack.c.b16 %v555, %v554
          %v591 = vpack.c.b16 %v557, %v556
          %v592 = vpack.c.b16 %v559, %v558
          %v593 = vpack.c.b16 %v561, %v560
          %v642 = vunpack.c.l.b16 %v418
          %v643 = vunpack.c.l.b16 %v419
          %v644 = vunpack.c.l.b16 %v420
          %v645 = vunpack.c.l.b16 %v421
          %v646 = vunpack.c.l.b16 %v422
          %v647 = vunpack.c.l.b16 %v423
          %v648 = vunpack.c.l.b16 %v424
          %v649 = vunpack.c.l.b16 %v425
          %v650 = vunpack.c.l.b16 %v426
          %v651 = vunpack.c.l.b16 %v427
          %v652 = vunpack.c.l.b16 %v428
          %v653 = vunpack.c.l.b16 %v429
          %v654 = vunpack.c.l.b16 %v430
          %v655 = vunpack.c.l.b16 %v431
          %v656 = vunpack.c.l.b16 %v432
          %v657 = vunpack.c.l.b16 %v433
          %v658 = vpack.c.b16 %v643, %v642
          %v659 = vpack.c.b16 %v645, %v644
          %v660 = vpack.c.b16 %v647, %v646
          %v661 = vpack.c.b16 %v649, %v648
          %v662 = vpack.c.b16 %v651, %v650
          %v663 = vpack.c.b16 %v653, %v652
          %v664 = vpack.c.b16 %v655, %v654
          %v665 = vpack.c.b16 %v657, %v656
          %674 = vmatprep.subr.bf16.mxu0 0
          %675 = vmatpush1.bf16.msra.mxu0 %v658
          %676 = vmatprep.subr.bf16.mxu0 0
          %677 = vmatpush1.bf16.msra.mxu0 %v659
          %678 = vmatprep.subr.bf16.mxu0 0
          %679 = vmatpush1.bf16.msra.mxu0 %v660
          %680 = vmatprep.subr.bf16.mxu0 0
          %681 = vmatpush1.bf16.msra.mxu0 %v661
          %682 = vmatprep.subr.bf16.mxu0 0
          %683 = vmatpush1.bf16.msra.mxu0 %v662
          %684 = vmatprep.subr.bf16.mxu0 0
          %685 = vmatpush1.bf16.msra.mxu0 %v663
          %686 = vmatprep.subr.bf16.mxu0 0
          %687 = vmatpush1.bf16.msra.mxu0 %v664
          %688 = vmatprep.subr.bf16.mxu0 0
          %689 = vmatpush1.bf16.msra.mxu0 %v665
          %690 = vmatprep.subr.bf16.mxu0 0
          %691 = vmatpush1.bf16.msra.mxu0 0
          %692 = vmatprep.subr.bf16.mxu0 0
          %693 = vmatpush1.bf16.msra.mxu0 0
          %694 = vmatprep.subr.bf16.mxu0 0
          %695 = vmatpush1.bf16.msra.mxu0 0
          %696 = vmatprep.subr.bf16.mxu0 0
          %697 = vmatpush1.bf16.msra.mxu0 0
          %698 = vmatprep.subr.bf16.mxu0 0
          %699 = vmatpush1.bf16.msra.mxu0 0
          %700 = vmatprep.subr.bf16.mxu0 0
          %701 = vmatpush1.bf16.msra.mxu0 0
          %702 = vmatprep.subr.bf16.mxu0 0
          %703 = vmatpush1.bf16.msra.mxu0 0
          %704 = vmatprep.subr.bf16.mxu0 0
          %705 = vmatpush1.bf16.msra.mxu0 0
          %706 = vmatprep.mubr.bf16.mxu0 0
          %707 = vmatmul.mubr.bf16.gmra.mrb[0].mxu0 %v562
          %v708 = vpop.f32.mrb[0].mxu0
          %v709 = vadd.f32 0.0, %v708
          %v710 = vpop.f32.mrb[0].mxu0
          %v711 = vpop.f32.mrb[0].mxu0
          %v712 = vadd.f32 0.0, %v711
          %v713 = vpop.f32.mrb[0].mxu0
          %714 = vmatprep.mubr.bf16.mxu0 0
          %715 = vmatmul.mubr.bf16.gmra.mrb[0].mxu0 %v563
          %v716 = vpop.f32.mrb[0].mxu0
          %v717 = vadd.f32 0.0, %v716
          %v718 = vpop.f32.mrb[0].mxu0
          %v719 = vpop.f32.mrb[0].mxu0
          %v720 = vadd.f32 0.0, %v719
          %v721 = vpop.f32.mrb[0].mxu0
          %722 = vmatprep.mubr.bf16.mxu0 0
          %723 = vmatmul.mubr.bf16.gmra.mrb[0].mxu0 %v564
          %v724 = vpop.f32.mrb[0].mxu0
          %v725 = vadd.f32 0.0, %v724
          %v726 = vpop.f32.mrb[0].mxu0
          %v727 = vpop.f32.mrb[0].mxu0
          %v728 = vadd.f32 0.0, %v727
          %v729 = vpop.f32.mrb[0].mxu0
          %730 = vmatprep.mubr.bf16.mxu0 0
          %731 = vmatmul.mubr.bf16.gmra.mrb[0].mxu0 %v565
          %v732 = vpop.f32.mrb[0].mxu0
          %v733 = vadd.f32 0.0, %v732
          %v734 = vpop.f32.mrb[0].mxu0
          %v735 = vpop.f32.mrb[0].mxu0
          %v736 = vadd.f32 0.0, %v735
          %v737 = vpop.f32.mrb[0].mxu0
          %738 = vmatprep.mubr.bf16.mxu0 0
          %739 = vmatmul.mubr.bf16.gmra.mrb[0].mxu0 %v566
          %v740 = vpop.f32.mrb[0].mxu0
          %v741 = vadd.f32 0.0, %v740
          %v742 = vpop.f32.mrb[0].mxu0
          %v743 = vpop.f32.mrb[0].mxu0
          %v744 = vadd.f32 0.0, %v743
          %v745 = vpop.f32.mrb[0].mxu0
          %746 = vmatprep.mubr.bf16.mxu0 0
          %747 = vmatmul.mubr.bf16.gmra.mrb[0].mxu0 %v567
          %v748 = vpop.f32.mrb[0].mxu0
          %v749 = vadd.f32 0.0, %v748
          %v750 = vpop.f32.mrb[0].mxu0
          %v751 = vpop.f32.mrb[0].mxu0
          %v752 = vadd.f32 0.0, %v751
          %v753 = vpop.f32.mrb[0].mxu0
          %754 = vmatprep.mubr.bf16.mxu0 0
          %755 = vmatmul.mubr.bf16.gmra.mrb[0].mxu0 %v568
          %v756 = vpop.f32.mrb[0].mxu0
          %v757 = vadd.f32 0.0, %v756
          %v758 = vpop.f32.mrb[0].mxu0
          %v759 = vpop.f32.mrb[0].mxu0
          %v760 = vadd.f32 0.0, %v759
          %v761 = vpop.f32.mrb[0].mxu0
          %762 = vmatprep.mubr.bf16.mxu0 0
          %763 = vmatmul.mubr.bf16.gmra.mrb[0].mxu0 %v569
          %v764 = vpop.f32.mrb[0].mxu0
          %v765 = vadd.f32 0.0, %v764
          %v766 = vpop.f32.mrb[0].mxu0
          %v767 = vpop.f32.mrb[0].mxu0
          %v768 = vadd.f32 0.0, %v767
          %v769 = vpop.f32.mrb[0].mxu0
          %770 = vmatprep.mubr.bf16.mxu0 0
          %771 = vmatmul.mubr.bf16.gmra.mrb[0].mxu0 %v570
          %v772 = vpop.f32.mrb[0].mxu0
          %v773 = vadd.f32 0.0, %v772
          %v774 = vpop.f32.mrb[0].mxu0
          %v775 = vpop.f32.mrb[0].mxu0
          %v776 = vadd.f32 0.0, %v775
          %v777 = vpop.f32.mrb[0].mxu0
          %778 = vmatprep.mubr.bf16.mxu0 0
          %779 = vmatmul.mubr.bf16.gmra.mrb[0].mxu0 %v571
          %v780 = vpop.f32.mrb[0].mxu0
          %v781 = vadd.f32 0.0, %v780
          %v782 = vpop.f32.mrb[0].mxu0
          %v783 = vpop.f32.mrb[0].mxu0
          %v784 = vadd.f32 0.0, %v783
          %v785 = vpop.f32.mrb[0].mxu0
          %786 = vmatprep.mubr.bf16.mxu0 0
          %787 = vmatmul.mubr.bf16.gmra.mrb[0].mxu0 %v572
          %v788 = vpop.f32.mrb[0].mxu0
          %v789 = vadd.f32 0.0, %v788
          %v790 = vpop.f32.mrb[0].mxu0
          %v791 = vpop.f32.mrb[0].mxu0
          %v792 = vadd.f32 0.0, %v791
          %v793 = vpop.f32.mrb[0].mxu0
          %794 = vmatprep.mubr.bf16.mxu0 0
          %795 = vmatmul.mubr.bf16.gmra.mrb[0].mxu0 %v573
          %v796 = vpop.f32.mrb[0].mxu0
          %v797 = vadd.f32 0.0, %v796
          %v798 = vpop.f32.mrb[0].mxu0
          %v799 = vpop.f32.mrb[0].mxu0
          %v800 = vadd.f32 0.0, %v799
          %v801 = vpop.f32.mrb[0].mxu0
          %802 = vmatprep.mubr.bf16.mxu0 0
          %803 = vmatmul.mubr.bf16.gmra.mrb[0].mxu0 %v574
          %v804 = vpop.f32.mrb[0].mxu0
          %v805 = vadd.f32 0.0, %v804
          %v806 = vpop.f32.mrb[0].mxu0
          %v807 = vpop.f32.mrb[0].mxu0
          %v808 = vadd.f32 0.0, %v807
          %v809 = vpop.f32.mrb[0].mxu0
          %810 = vmatprep.mubr.bf16.mxu0 0
          %811 = vmatmul.mubr.bf16.gmra.mrb[0].mxu0 %v575
          %v812 = vpop.f32.mrb[0].mxu0
          %v813 = vadd.f32 0.0, %v812
          %v814 = vpop.f32.mrb[0].mxu0
          %v815 = vpop.f32.mrb[0].mxu0
          %v816 = vadd.f32 0.0, %v815
          %v817 = vpop.f32.mrb[0].mxu0
          %818 = vmatprep.mubr.bf16.mxu0 0
          %819 = vmatmul.mubr.bf16.gmra.mrb[0].mxu0 %v576
          %v820 = vpop.f32.mrb[0].mxu0
          %v821 = vadd.f32 0.0, %v820
          %v822 = vpop.f32.mrb[0].mxu0
          %v823 = vpop.f32.mrb[0].mxu0
          %v824 = vadd.f32 0.0, %v823
          %v825 = vpop.f32.mrb[0].mxu0
          %826 = vmatprep.mubr.bf16.mxu0 0
          %827 = vmatmul.mubr.bf16.gmra.mrb[0].mxu0 %v577
          %v828 = vpop.f32.mrb[0].mxu0
          %v829 = vadd.f32 0.0, %v828
          %v830 = vpop.f32.mrb[0].mxu0
          %v831 = vpop.f32.mrb[0].mxu0
          %v832 = vadd.f32 0.0, %v831
          %v833 = vpop.f32.mrb[0].mxu0
          %834 = vmatprep.mubr.bf16.mxu0 0
          %835 = vmatmul.mubr.bf16.gmra.mrb[0].mxu0 %v578
          %v836 = vpop.f32.mrb[0].mxu0
          %v837 = vadd.f32 0.0, %v836
          %v838 = vpop.f32.mrb[0].mxu0
          %v839 = vpop.f32.mrb[0].mxu0
          %v840 = vadd.f32 0.0, %v839
          %v841 = vpop.f32.mrb[0].mxu0
          %842 = vmatprep.mubr.bf16.mxu0 0
          %843 = vmatmul.mubr.bf16.gmra.mrb[0].mxu0 %v579
          %v844 = vpop.f32.mrb[0].mxu0
          %v845 = vadd.f32 0.0, %v844
          %v846 = vpop.f32.mrb[0].mxu0
          %v847 = vpop.f32.mrb[0].mxu0
          %v848 = vadd.f32 0.0, %v847
          %v849 = vpop.f32.mrb[0].mxu0
          %850 = vmatprep.mubr.bf16.mxu0 0
          %851 = vmatmul.mubr.bf16.gmra.mrb[0].mxu0 %v580
          %v852 = vpop.f32.mrb[0].mxu0
          %v853 = vadd.f32 0.0, %v852
          %v854 = vpop.f32.mrb[0].mxu0
          %v855 = vpop.f32.mrb[0].mxu0
          %v856 = vadd.f32 0.0, %v855
          %v857 = vpop.f32.mrb[0].mxu0
          %858 = vmatprep.mubr.bf16.mxu0 0
          %859 = vmatmul.mubr.bf16.gmra.mrb[0].mxu0 %v581
          %v860 = vpop.f32.mrb[0].mxu0
          %v861 = vadd.f32 0.0, %v860
          %v862 = vpop.f32.mrb[0].mxu0
          %v863 = vpop.f32.mrb[0].mxu0
          %v864 = vadd.f32 0.0, %v863
          %v865 = vpop.f32.mrb[0].mxu0
          %866 = vmatprep.mubr.bf16.mxu0 0
          %867 = vmatmul.mubr.bf16.gmra.mrb[0].mxu0 %v582
          %v868 = vpop.f32.mrb[0].mxu0
          %v869 = vadd.f32 0.0, %v868
          %v870 = vpop.f32.mrb[0].mxu0
          %v871 = vpop.f32.mrb[0].mxu0
          %v872 = vadd.f32 0.0, %v871
          %v873 = vpop.f32.mrb[0].mxu0
          %874 = vmatprep.mubr.bf16.mxu0 0
          %875 = vmatmul.mubr.bf16.gmra.mrb[0].mxu0 %v583
          %v876 = vpop.f32.mrb[0].mxu0
          %v877 = vadd.f32 0.0, %v876
          %v878 = vpop.f32.mrb[0].mxu0
          %v879 = vpop.f32.mrb[0].mxu0
          %v880 = vadd.f32 0.0, %v879
          %v881 = vpop.f32.mrb[0].mxu0
          %882 = vmatprep.mubr.bf16.mxu0 0
          %883 = vmatmul.mubr.bf16.gmra.mrb[0].mxu0 %v584
          %v884 = vpop.f32.mrb[0].mxu0
          %v885 = vadd.f32 0.0, %v884
          %v886 = vpop.f32.mrb[0].mxu0
          %v887 = vpop.f32.mrb[0].mxu0
          %v888 = vadd.f32 0.0, %v887
          %v889 = vpop.f32.mrb[0].mxu0
          %890 = vmatprep.mubr.bf16.mxu0 0
          %891 = vmatmul.mubr.bf16.gmra.mrb[0].mxu0 %v585
          %v892 = vpop.f32.mrb[0].mxu0
          %v893 = vadd.f32 0.0, %v892
          %v894 = vpop.f32.mrb[0].mxu0
          %v895 = vpop.f32.mrb[0].mxu0
          %v896 = vadd.f32 0.0, %v895
          %v897 = vpop.f32.mrb[0].mxu0
          %898 = vmatprep.mubr.bf16.mxu0 0
          %899 = vmatmul.mubr.bf16.gmra.mrb[0].mxu0 %v586
          %v900 = vpop.f32.mrb[0].mxu0
          %v901 = vadd.f32 0.0, %v900
          %v902 = vpop.f32.mrb[0].mxu0
          %v903 = vpop.f32.mrb[0].mxu0
          %v904 = vadd.f32 0.0, %v903
          %v905 = vpop.f32.mrb[0].mxu0
          %906 = vmatprep.mubr.bf16.mxu0 0
          %907 = vmatmul.mubr.bf16.gmra.mrb[0].mxu0 %v587
          %v908 = vpop.f32.mrb[0].mxu0
          %v909 = vadd.f32 0.0, %v908
          %v910 = vpop.f32.mrb[0].mxu0
          %v911 = vpop.f32.mrb[0].mxu0
          %v912 = vadd.f32 0.0, %v911
          %v913 = vpop.f32.mrb[0].mxu0
          %914 = vmatprep.mubr.bf16.mxu0 0
          %915 = vmatmul.mubr.bf16.gmra.mrb[0].mxu0 %v588
          %v916 = vpop.f32.mrb[0].mxu0
          %v917 = vadd.f32 0.0, %v916
          %v918 = vpop.f32.mrb[0].mxu0
          %v919 = vpop.f32.mrb[0].mxu0
          %v920 = vadd.f32 0.0, %v919
          %v921 = vpop.f32.mrb[0].mxu0
          %922 = vmatprep.mubr.bf16.mxu0 0
          %923 = vmatmul.mubr.bf16.gmra.mrb[0].mxu0 %v589
          %v924 = vpop.f32.mrb[0].mxu0
          %v925 = vadd.f32 0.0, %v924
          %v926 = vpop.f32.mrb[0].mxu0
          %v927 = vpop.f32.mrb[0].mxu0
          %v928 = vadd.f32 0.0, %v927
          %v929 = vpop.f32.mrb[0].mxu0
          %930 = vmatprep.mubr.bf16.mxu0 0
          %931 = vmatmul.mubr.bf16.gmra.mrb[0].mxu0 %v590
          %v932 = vpop.f32.mrb[0].mxu0
          %v933 = vadd.f32 0.0, %v932
          %v934 = vpop.f32.mrb[0].mxu0
          %v935 = vpop.f32.mrb[0].mxu0
          %v936 = vadd.f32 0.0, %v935
          %v937 = vpop.f32.mrb[0].mxu0
          %938 = vmatprep.mubr.bf16.mxu0 0
          %939 = vmatmul.mubr.bf16.gmra.mrb[0].mxu0 %v591
          %v940 = vpop.f32.mrb[0].mxu0
          %v941 = vadd.f32 0.0, %v940
          %v942 = vpop.f32.mrb[0].mxu0
          %v943 = vpop.f32.mrb[0].mxu0
          %v944 = vadd.f32 0.0, %v943
          %v945 = vpop.f32.mrb[0].mxu0
          %946 = vmatprep.mubr.bf16.mxu0 0
          %947 = vmatmul.mubr.bf16.gmra.mrb[0].mxu0 %v592
          %v948 = vpop.f32.mrb[0].mxu0
          %v949 = vadd.f32 0.0, %v948
          %v950 = vpop.f32.mrb[0].mxu0
          %v951 = vpop.f32.mrb[0].mxu0
          %v952 = vadd.f32 0.0, %v951
          %v953 = vpop.f32.mrb[0].mxu0
          %954 = vmatprep.mubr.bf16.mxu0 0
          %955 = vmatmul.mubr.bf16.gmra.mrb[0].mxu0 %v593
          %v956 = vpop.f32.mrb[0].mxu0
          %v957 = vadd.f32 0.0, %v956
          %v958 = vpop.f32.mrb[0].mxu0
          %v959 = vpop.f32.mrb[0].mxu0
          %v960 = vadd.f32 0.0, %v959
          %v961 = vpop.f32.mrb[0].mxu0
          %962 = vdwg.mxu0
          %v963 = vpack.c.bf16 %v712, %v709
          %v964 = vpack.c.bf16 %v720, %v717
          %v965 = vpack.c.bf16 %v728, %v725
          %v966 = vpack.c.bf16 %v736, %v733
          %v967 = vpack.c.bf16 %v744, %v741
          %v968 = vpack.c.bf16 %v752, %v749
          %v969 = vpack.c.bf16 %v760, %v757
          %v970 = vpack.c.bf16 %v768, %v765
          %v971 = vpack.c.bf16 %v776, %v773
          %v972 = vpack.c.bf16 %v784, %v781
          %v973 = vpack.c.bf16 %v792, %v789
          %v974 = vpack.c.bf16 %v800, %v797
          %v975 = vpack.c.bf16 %v808, %v805
          %v976 = vpack.c.bf16 %v816, %v813
          %v977 = vpack.c.bf16 %v824, %v821
          %v978 = vpack.c.bf16 %v832, %v829
          %v979 = vpack.c.bf16 %v840, %v837
          %v980 = vpack.c.bf16 %v848, %v845
          %v981 = vpack.c.bf16 %v856, %v853
          %v982 = vpack.c.bf16 %v864, %v861
          %v983 = vpack.c.bf16 %v872, %v869
          %v984 = vpack.c.bf16 %v880, %v877
          %v985 = vpack.c.bf16 %v888, %v885
          %v986 = vpack.c.bf16 %v896, %v893
          %v987 = vpack.c.bf16 %v904, %v901
          %v988 = vpack.c.bf16 %v912, %v909
          %v989 = vpack.c.bf16 %v920, %v917
          %v990 = vpack.c.bf16 %v928, %v925
          %v991 = vpack.c.bf16 %v936, %v933
          %v992 = vpack.c.bf16 %v944, %v941
          %v993 = vpack.c.bf16 %v952, %v949
          %v994 = vpack.c.bf16 %v960, %v957
          %995 = vst [vmem:[#allocation2] sm:$0xff] %v963
          %996 = vst [vmem:[#allocation2 + $0x8] sm:$0xff] %v964
          %997 = vst [vmem:[#allocation2 + $0x10] sm:$0xff] %v965
          %998 = vst [vmem:[#allocation2 + $0x18] sm:$0xff] %v966
          %999 = vst [vmem:[#allocation2 + $0x20] sm:$0xff] %v967
          %1000 = vst [vmem:[#allocation2 + $0x28] sm:$0xff] %v968
          %1001 = vst [vmem:[#allocation2 + $0x30] sm:$0xff] %v969
          %1002 = vst [vmem:[#allocation2 + $0x38] sm:$0xff] %v970
          %1003 = vst [vmem:[#allocation2 + $0x40] sm:$0xff] %v971
          %1004 = vst [vmem:[#allocation2 + $0x48] sm:$0xff] %v972
          %1005 = vst [vmem:[#allocation2 + $0x50] sm:$0xff] %v973
          %1006 = vst [vmem:[#allocation2 + $0x58] sm:$0xff] %v974
          %1007 = vst [vmem:[#allocation2 + $0x60] sm:$0xff] %v975
          %1008 = vst [vmem:[#allocation2 + $0x68] sm:$0xff] %v976
          %1009 = vst [vmem:[#allocation2 + $0x70] sm:$0xff] %v977
          %1010 = vst [vmem:[#allocation2 + $0x78] sm:$0xff] %v978
          %1011 = vst [vmem:[#allocation2 + $0x80] sm:$0xff] %v979
          %1012 = vst [vmem:[#allocation2 + $0x88] sm:$0xff] %v980
          %1013 = vst [vmem:[#allocation2 + $0x90] sm:$0xff] %v981
          %1014 = vst [vmem:[#allocation2 + $0x98] sm:$0xff] %v982
          %1015 = vst [vmem:[#allocation2 + $0xa0] sm:$0xff] %v983
          %1016 = vst [vmem:[#allocation2 + $0xa8] sm:$0xff] %v984
          %1017 = vst [vmem:[#allocation2 + $0xb0] sm:$0xff] %v985
          %1018 = vst [vmem:[#allocation2 + $0xb8] sm:$0xff] %v986
          %1019 = vst [vmem:[#allocation2 + $0xc0] sm:$0xff] %v987
          %1020 = vst [vmem:[#allocation2 + $0xc8] sm:$0xff] %v988
          %1021 = vst [vmem:[#allocation2 + $0xd0] sm:$0xff] %v989
          %1022 = vst [vmem:[#allocation2 + $0xd8] sm:$0xff] %v990
          %1023 = vst [vmem:[#allocation2 + $0xe0] sm:$0xff] %v991
          %1024 = vst [vmem:[#allocation2 + $0xe8] sm:$0xff] %v992
          %1025 = vst [vmem:[#allocation2 + $0xf0] sm:$0xff] %v993
          %1026 = vst [vmem:[#allocation2 + $0xf8] sm:$0xff] %v994
        $region64: #{tpu_custom_call.1} parent=43 // pred_fallthru
          _
        // Predicated region
        $region65: #{tpu_custom_call.1} parent=43 // pred_check
          %p1027 = pneg %p349
        $region66: #{tpu_custom_call.1} parent=43 // pred_check_branch
          %1029 = sbr.rel (%p1027) target = $region68
        $region67: #{tpu_custom_call.1} parent=43 // pred_region
          %1030 = vst [vmem:[#allocation4] sm:$0xff] 0.0
          %1031 = vst [vmem:[#allocation4 + $0x8] sm:$0xff] 0.0
          %1032 = vst [vmem:[#allocation4 + $0x10] sm:$0xff] 0.0
          %1033 = vst [vmem:[#allocation4 + $0x18] sm:$0xff] 0.0
          %1034 = vst [vmem:[#allocation4 + $0x20] sm:$0xff] 0.0
          %1035 = vst [vmem:[#allocation4 + $0x28] sm:$0xff] 0.0
          %1036 = vst [vmem:[#allocation4 + $0x30] sm:$0xff] 0.0
          %1037 = vst [vmem:[#allocation4 + $0x38] sm:$0xff] 0.0
          %1038 = vst [vmem:[#allocation4 + $0x40] sm:$0xff] 0.0
          %1039 = vst [vmem:[#allocation4 + $0x48] sm:$0xff] 0.0
          %1040 = vst [vmem:[#allocation4 + $0x50] sm:$0xff] 0.0
          %1041 = vst [vmem:[#allocation4 + $0x58] sm:$0xff] 0.0
          %1042 = vst [vmem:[#allocation4 + $0x60] sm:$0xff] 0.0
          %1043 = vst [vmem:[#allocation4 + $0x68] sm:$0xff] 0.0
          %1044 = vst [vmem:[#allocation4 + $0x70] sm:$0xff] 0.0
          %1045 = vst [vmem:[#allocation4 + $0x78] sm:$0xff] 0.0
          %1046 = vst [vmem:[#allocation4 + $0x80] sm:$0xff] 0.0
          %1047 = vst [vmem:[#allocation4 + $0x88] sm:$0xff] 0.0
          %1048 = vst [vmem:[#allocation4 + $0x90] sm:$0xff] 0.0
          %1049 = vst [vmem:[#allocation4 + $0x98] sm:$0xff] 0.0
          %1050 = vst [vmem:[#allocation4 + $0xa0] sm:$0xff] 0.0
          %1051 = vst [vmem:[#allocation4 + $0xa8] sm:$0xff] 0.0
          %1052 = vst [vmem:[#allocation4 + $0xb0] sm:$0xff] 0.0
          %1053 = vst [vmem:[#allocation4 + $0xb8] sm:$0xff] 0.0
          %1054 = vst [vmem:[#allocation4 + $0xc0] sm:$0xff] 0.0
          %1055 = vst [vmem:[#allocation4 + $0xc8] sm:$0xff] 0.0
          %1056 = vst [vmem:[#allocation4 + $0xd0] sm:$0xff] 0.0
          %1057 = vst [vmem:[#allocation4 + $0xd8] sm:$0xff] 0.0
          %1058 = vst [vmem:[#allocation4 + $0xe0] sm:$0xff] 0.0
          %1059 = vst [vmem:[#allocation4 + $0xe8] sm:$0xff] 0.0
          %1060 = vst [vmem:[#allocation4 + $0xf0] sm:$0xff] 0.0
          %1061 = vst [vmem:[#allocation4 + $0xf8] sm:$0xff] 0.0
        $region68: #{tpu_custom_call.1} parent=43 // pred_fallthru
          _
        %v1062 = vld [vmem:[%s299] sm:$0xff]
        %v1063 = vld [vmem:[%s299 + $0x8] sm:$0xff]
        %v1064 = vld [vmem:[%s299 + $0x10] sm:$0xff]
        %v1065 = vld [vmem:[%s299 + $0x18] sm:$0xff]
        %v1066 = vld [vmem:[%s299 + $0x20] sm:$0xff]
        %v1067 = vld [vmem:[%s299 + $0x28] sm:$0xff]
        %v1068 = vld [vmem:[%s299 + $0x30] sm:$0xff]
        %v1069 = vld [vmem:[%s299 + $0x38] sm:$0xff]
        %v1070 = vld [vmem:[%s299 + $0x40] sm:$0xff]
        %v1071 = vld [vmem:[%s299 + $0x48] sm:$0xff]
        %v1072 = vld [vmem:[%s299 + $0x50] sm:$0xff]
        %v1073 = vld [vmem:[%s299 + $0x58] sm:$0xff]
        %v1074 = vld [vmem:[%s299 + $0x60] sm:$0xff]
        %v1075 = vld [vmem:[%s299 + $0x68] sm:$0xff]
        %v1076 = vld [vmem:[%s299 + $0x70] sm:$0xff]
        %v1077 = vld [vmem:[%s299 + $0x78] sm:$0xff]
        %v1078 = vld [vmem:[%s299 + $0x80] sm:$0xff]
        %v1079 = vld [vmem:[%s299 + $0x88] sm:$0xff]
        %v1080 = vld [vmem:[%s299 + $0x90] sm:$0xff]
        %v1081 = vld [vmem:[%s299 + $0x98] sm:$0xff]
        %v1082 = vld [vmem:[%s299 + $0xa0] sm:$0xff]
        %v1083 = vld [vmem:[%s299 + $0xa8] sm:$0xff]
        %v1084 = vld [vmem:[%s299 + $0xb0] sm:$0xff]
        %v1085 = vld [vmem:[%s299 + $0xb8] sm:$0xff]
        %v1086 = vld [vmem:[%s299 + $0xc0] sm:$0xff]
        %v1087 = vld [vmem:[%s299 + $0xc8] sm:$0xff]
        %v1088 = vld [vmem:[%s299 + $0xd0] sm:$0xff]
        %v1089 = vld [vmem:[%s299 + $0xd8] sm:$0xff]
        %v1090 = vld [vmem:[%s299 + $0xe0] sm:$0xff]
        %v1091 = vld [vmem:[%s299 + $0xe8] sm:$0xff]
        %v1092 = vld [vmem:[%s299 + $0xf0] sm:$0xff]
        %v1093 = vld [vmem:[%s299 + $0xf8] sm:$0xff]
        %s1094 = smul.u32 %s32, 256
        // Predicated region
        $region69: #{tpu_custom_call.1} parent=43 // pred_check
          %p1095 = pneg %p345
        $region70: #{tpu_custom_call.1} parent=43 // pred_check_branch
          %1097 = sbr.rel (%p1095) target = $region72
        $region71: #{tpu_custom_call.1} parent=43 // pred_region
          %v1098 = vld [vmem:[#allocation4] sm:$0xff]
          %v1099 = vld [vmem:[#allocation4 + $0x8] sm:$0xff]
          %v1100 = vld [vmem:[#allocation4 + $0x10] sm:$0xff]
          %v1101 = vld [vmem:[#allocation4 + $0x18] sm:$0xff]
          %v1102 = vld [vmem:[#allocation4 + $0x20] sm:$0xff]
          %v1103 = vld [vmem:[#allocation4 + $0x28] sm:$0xff]
          %v1104 = vld [vmem:[#allocation4 + $0x30] sm:$0xff]
          %v1105 = vld [vmem:[#allocation4 + $0x38] sm:$0xff]
          %v1106 = vld [vmem:[#allocation4 + $0x40] sm:$0xff]
          %v1107 = vld [vmem:[#allocation4 + $0x48] sm:$0xff]
          %v1108 = vld [vmem:[#allocation4 + $0x50] sm:$0xff]
          %v1109 = vld [vmem:[#allocation4 + $0x58] sm:$0xff]
          %v1110 = vld [vmem:[#allocation4 + $0x60] sm:$0xff]
          %v1111 = vld [vmem:[#allocation4 + $0x68] sm:$0xff]
          %v1112 = vld [vmem:[#allocation4 + $0x70] sm:$0xff]
          %v1113 = vld [vmem:[#allocation4 + $0x78] sm:$0xff]
          %v1114 = vld [vmem:[#allocation4 + $0x80] sm:$0xff]
          %v1115 = vld [vmem:[#allocation4 + $0x88] sm:$0xff]
          %v1116 = vld [vmem:[#allocation4 + $0x90] sm:$0xff]
          %v1117 = vld [vmem:[#allocation4 + $0x98] sm:$0xff]
          %v1118 = vld [vmem:[#allocation4 + $0xa0] sm:$0xff]
          %v1119 = vld [vmem:[#allocation4 + $0xa8] sm:$0xff]
          %v1120 = vld [vmem:[#allocation4 + $0xb0] sm:$0xff]
          %v1121 = vld [vmem:[#allocation4 + $0xb8] sm:$0xff]
          %v1122 = vld [vmem:[#allocation4 + $0xc0] sm:$0xff]
          %v1123 = vld [vmem:[#allocation4 + $0xc8] sm:$0xff]
          %v1124 = vld [vmem:[#allocation4 + $0xd0] sm:$0xff]
          %v1125 = vld [vmem:[#allocation4 + $0xd8] sm:$0xff]
          %v1126 = vld [vmem:[#allocation4 + $0xe0] sm:$0xff]
          %v1127 = vld [vmem:[#allocation4 + $0xe8] sm:$0xff]
          %v1128 = vld [vmem:[#allocation4 + $0xf0] sm:$0xff]
          %v1129 = vld [vmem:[#allocation4 + $0xf8] sm:$0xff]
          %s1130 = sshra.s32 %s1094, 4
          %s1131 = sand.u32 %s1094, 15
          %s1132 = smul.addr %s1130, 8
          %s1133 = scalar_lea.vmem [#allocation2], %s1132
          %v1134 = vld [vmem:[%s1133] sm:$0xff]
          %v1135 = vld [vmem:[%s1133 + $0x8] sm:$0xff]
          %v1136 = vld [vmem:[%s1133 + $0x10] sm:$0xff]
          %v1137 = vld [vmem:[%s1133 + $0x18] sm:$0xff]
          %v1138 = vld [vmem:[%s1133 + $0x20] sm:$0xff]
          %v1139 = vld [vmem:[%s1133 + $0x28] sm:$0xff]
          %v1140 = vld [vmem:[%s1133 + $0x30] sm:$0xff]
          %v1141 = vld [vmem:[%s1133 + $0x38] sm:$0xff]
          %v1142 = vld [vmem:[%s1133 + $0x40] sm:$0xff]
          %v1143 = vld [vmem:[%s1133 + $0x48] sm:$0xff]
          %v1144 = vld [vmem:[%s1133 + $0x50] sm:$0xff]
          %v1145 = vld [vmem:[%s1133 + $0x58] sm:$0xff]
          %v1146 = vld [vmem:[%s1133 + $0x60] sm:$0xff]
          %v1147 = vld [vmem:[%s1133 + $0x68] sm:$0xff]
          %v1148 = vld [vmem:[%s1133 + $0x70] sm:$0xff]
          %v1149 = vld [vmem:[%s1133 + $0x78] sm:$0xff]
          %v1182 = vunpack.c.l.b16 %v1062
          %v1183 = vunpack.c.h.b16 %v1062
          %v1184 = vunpack.c.l.b16 %v1063
          %v1185 = vunpack.c.h.b16 %v1063
          %v1186 = vunpack.c.l.b16 %v1064
          %v1187 = vunpack.c.h.b16 %v1064
          %v1188 = vunpack.c.l.b16 %v1065
          %v1189 = vunpack.c.h.b16 %v1065
          %v1190 = vunpack.c.l.b16 %v1066
          %v1191 = vunpack.c.h.b16 %v1066
          %v1192 = vunpack.c.l.b16 %v1067
          %v1193 = vunpack.c.h.b16 %v1067
          %v1194 = vunpack.c.l.b16 %v1068
          %v1195 = vunpack.c.h.b16 %v1068
          %v1196 = vunpack.c.l.b16 %v1069
          %v1197 = vunpack.c.h.b16 %v1069
          %v1198 = vunpack.c.l.b16 %v1070
          %v1199 = vunpack.c.h.b16 %v1070
          %v1200 = vunpack.c.l.b16 %v1071
          %v1201 = vunpack.c.h.b16 %v1071
          %v1202 = vunpack.c.l.b16 %v1072
          %v1203 = vunpack.c.h.b16 %v1072
          %v1204 = vunpack.c.l.b16 %v1073
          %v1205 = vunpack.c.h.b16 %v1073
          %v1206 = vunpack.c.l.b16 %v1074
          %v1207 = vunpack.c.h.b16 %v1074
          %v1208 = vunpack.c.l.b16 %v1075
          %v1209 = vunpack.c.h.b16 %v1075
          %v1210 = vunpack.c.l.b16 %v1076
          %v1211 = vunpack.c.h.b16 %v1076
          %v1212 = vunpack.c.l.b16 %v1077
          %v1213 = vunpack.c.h.b16 %v1077
          %v1214 = vunpack.c.l.b16 %v1078
          %v1215 = vunpack.c.h.b16 %v1078
          %v1216 = vunpack.c.l.b16 %v1079
          %v1217 = vunpack.c.h.b16 %v1079
          %v1218 = vunpack.c.l.b16 %v1080
          %v1219 = vunpack.c.h.b16 %v1080
          %v1220 = vunpack.c.l.b16 %v1081
          %v1221 = vunpack.c.h.b16 %v1081
          %v1222 = vunpack.c.l.b16 %v1082
          %v1223 = vunpack.c.h.b16 %v1082
          %v1224 = vunpack.c.l.b16 %v1083
          %v1225 = vunpack.c.h.b16 %v1083
          %v1226 = vunpack.c.l.b16 %v1084
          %v1227 = vunpack.c.h.b16 %v1084
          %v1228 = vunpack.c.l.b16 %v1085
          %v1229 = vunpack.c.h.b16 %v1085
          %v1230 = vunpack.c.l.b16 %v1086
          %v1231 = vunpack.c.h.b16 %v1086
          %v1232 = vunpack.c.l.b16 %v1087
          %v1233 = vunpack.c.h.b16 %v1087
          %v1234 = vunpack.c.l.b16 %v1088
          %v1235 = vunpack.c.h.b16 %v1088
          %v1236 = vunpack.c.l.b16 %v1089
          %v1237 = vunpack.c.h.b16 %v1089
          %v1238 = vunpack.c.l.b16 %v1090
          %v1239 = vunpack.c.h.b16 %v1090
          %v1240 = vunpack.c.l.b16 %v1091
          %v1241 = vunpack.c.h.b16 %v1091
          %v1242 = vunpack.c.l.b16 %v1092
          %v1243 = vunpack.c.h.b16 %v1092
          %v1244 = vunpack.c.l.b16 %v1093
          %v1245 = vunpack.c.h.b16 %v1093
          %v1246 = vpack.c.b16 %v1184, %v1182
          %v1247 = vpack.c.b16 %v1185, %v1183
          %v1248 = vpack.c.b16 %v1188, %v1186
          %v1249 = vpack.c.b16 %v1189, %v1187
          %v1250 = vpack.c.b16 %v1192, %v1190
          %v1251 = vpack.c.b16 %v1193, %v1191
          %v1252 = vpack.c.b16 %v1196, %v1194
          %v1253 = vpack.c.b16 %v1197, %v1195
          %v1254 = vpack.c.b16 %v1200, %v1198
          %v1255 = vpack.c.b16 %v1201, %v1199
          %v1256 = vpack.c.b16 %v1204, %v1202
          %v1257 = vpack.c.b16 %v1205, %v1203
          %v1258 = vpack.c.b16 %v1208, %v1206
          %v1259 = vpack.c.b16 %v1209, %v1207
          %v1260 = vpack.c.b16 %v1212, %v1210
          %v1261 = vpack.c.b16 %v1213, %v1211
          %v1262 = vpack.c.b16 %v1216, %v1214
          %v1263 = vpack.c.b16 %v1217, %v1215
          %v1264 = vpack.c.b16 %v1220, %v1218
          %v1265 = vpack.c.b16 %v1221, %v1219
          %v1266 = vpack.c.b16 %v1224, %v1222
          %v1267 = vpack.c.b16 %v1225, %v1223
          %v1268 = vpack.c.b16 %v1228, %v1226
          %v1269 = vpack.c.b16 %v1229, %v1227
          %v1270 = vpack.c.b16 %v1232, %v1230
          %v1271 = vpack.c.b16 %v1233, %v1231
          %v1272 = vpack.c.b16 %v1236, %v1234
          %v1273 = vpack.c.b16 %v1237, %v1235
          %v1274 = vpack.c.b16 %v1240, %v1238
          %v1275 = vpack.c.b16 %v1241, %v1239
          %v1276 = vpack.c.b16 %v1244, %v1242
          %v1277 = vpack.c.b16 %v1245, %v1243
          %1310 = vmatprep.subr.bf16.mxu0 0
          %1311 = vmatpush1.bf16.msra.mxu0 %v1134
          %1312 = vmatprep.subr.bf16.mxu0 0
          %1313 = vmatpush1.bf16.msra.mxu0 %v1135
          %1314 = vmatprep.subr.bf16.mxu0 0
          %1315 = vmatpush1.bf16.msra.mxu0 %v1136
          %1316 = vmatprep.subr.bf16.mxu0 0
          %1317 = vmatpush1.bf16.msra.mxu0 %v1137
          %1318 = vmatprep.subr.bf16.mxu0 0
          %1319 = vmatpush1.bf16.msra.mxu0 %v1138
          %1320 = vmatprep.subr.bf16.mxu0 0
          %1321 = vmatpush1.bf16.msra.mxu0 %v1139
          %1322 = vmatprep.subr.bf16.mxu0 0
          %1323 = vmatpush1.bf16.msra.mxu0 %v1140
          %1324 = vmatprep.subr.bf16.mxu0 0
          %1325 = vmatpush1.bf16.msra.mxu0 %v1141
          %1326 = vmatprep.subr.bf16.mxu0 0
          %1327 = vmatpush1.bf16.msra.mxu0 %v1142
          %1328 = vmatprep.subr.bf16.mxu0 0
          %1329 = vmatpush1.bf16.msra.mxu0 %v1143
          %1330 = vmatprep.subr.bf16.mxu0 0
          %1331 = vmatpush1.bf16.msra.mxu0 %v1144
          %1332 = vmatprep.subr.bf16.mxu0 0
          %1333 = vmatpush1.bf16.msra.mxu0 %v1145
          %1334 = vmatprep.subr.bf16.mxu0 0
          %1335 = vmatpush1.bf16.msra.mxu0 %v1146
          %1336 = vmatprep.subr.bf16.mxu0 0
          %1337 = vmatpush1.bf16.msra.mxu0 %v1147
          %1338 = vmatprep.subr.bf16.mxu0 0
          %1339 = vmatpush1.bf16.msra.mxu0 %v1148
          %1340 = vmatprep.subr.bf16.mxu0 0
          %1341 = vmatpush1.bf16.msra.mxu0 %v1149
          %1342 = vmatprep.mubr.bf16.mxu0 %v1247
          %1343 = vmatmul.mubr.bf16.gmra.mrb[0].mxu0 %v1246
          %v1344 = vpop.f32.mrb[0].mxu0
          %v1345 = vadd.f32 0.0, %v1344
          %v1346 = vpop.f32.mrb[0].mxu0
          %v1347 = vpop.f32.mrb[0].mxu0
          %v1348 = vadd.f32 0.0, %v1347
          %v1349 = vpop.f32.mrb[0].mxu0
          %1350 = vmatprep.mubr.bf16.mxu0 %v1249
          %1351 = vmatmul.mubr.bf16.gmra.mrb[0].mxu0 %v1248
          %v1352 = vpop.f32.mrb[0].mxu0
          %v1353 = vadd.f32 0.0, %v1352
          %v1354 = vpop.f32.mrb[0].mxu0
          %v1355 = vpop.f32.mrb[0].mxu0
          %v1356 = vadd.f32 0.0, %v1355
          %v1357 = vpop.f32.mrb[0].mxu0
          %1358 = vmatprep.mubr.bf16.mxu0 %v1251
          %1359 = vmatmul.mubr.bf16.gmra.mrb[0].mxu0 %v1250
          %v1360 = vpop.f32.mrb[0].mxu0
          %v1361 = vadd.f32 0.0, %v1360
          %v1362 = vpop.f32.mrb[0].mxu0
          %v1363 = vpop.f32.mrb[0].mxu0
          %v1364 = vadd.f32 0.0, %v1363
          %v1365 = vpop.f32.mrb[0].mxu0
          %1366 = vmatprep.mubr.bf16.mxu0 %v1253
          %1367 = vmatmul.mubr.bf16.gmra.mrb[0].mxu0 %v1252
          %v1368 = vpop.f32.mrb[0].mxu0
          %v1369 = vadd.f32 0.0, %v1368
          %v1370 = vpop.f32.mrb[0].mxu0
          %v1371 = vpop.f32.mrb[0].mxu0
          %v1372 = vadd.f32 0.0, %v1371
          %v1373 = vpop.f32.mrb[0].mxu0
          %1374 = vmatprep.mubr.bf16.mxu0 %v1255
          %1375 = vmatmul.mubr.bf16.gmra.mrb[0].mxu0 %v1254
          %v1376 = vpop.f32.mrb[0].mxu0
          %v1377 = vadd.f32 0.0, %v1376
          %v1378 = vpop.f32.mrb[0].mxu0
          %v1379 = vpop.f32.mrb[0].mxu0
          %v1380 = vadd.f32 0.0, %v1379
          %v1381 = vpop.f32.mrb[0].mxu0
          %1382 = vmatprep.mubr.bf16.mxu0 %v1257
          %1383 = vmatmul.mubr.bf16.gmra.mrb[0].mxu0 %v1256
          %v1384 = vpop.f32.mrb[0].mxu0
          %v1385 = vadd.f32 0.0, %v1384
          %v1386 = vpop.f32.mrb[0].mxu0
          %v1387 = vpop.f32.mrb[0].mxu0
          %v1388 = vadd.f32 0.0, %v1387
          %v1389 = vpop.f32.mrb[0].mxu0
          %1390 = vmatprep.mubr.bf16.mxu0 %v1259
          %1391 = vmatmul.mubr.bf16.gmra.mrb[0].mxu0 %v1258
          %v1392 = vpop.f32.mrb[0].mxu0
          %v1393 = vadd.f32 0.0, %v1392
          %v1394 = vpop.f32.mrb[0].mxu0
          %v1395 = vpop.f32.mrb[0].mxu0
          %v1396 = vadd.f32 0.0, %v1395
          %v1397 = vpop.f32.mrb[0].mxu0
          %1398 = vmatprep.mubr.bf16.mxu0 %v1261
          %1399 = vmatmul.mubr.bf16.gmra.mrb[0].mxu0 %v1260
          %v1400 = vpop.f32.mrb[0].mxu0
          %v1401 = vadd.f32 0.0, %v1400
          %v1402 = vpop.f32.mrb[0].mxu0
          %v1403 = vpop.f32.mrb[0].mxu0
          %v1404 = vadd.f32 0.0, %v1403
          %v1405 = vpop.f32.mrb[0].mxu0
          %1406 = vmatprep.mubr.bf16.mxu0 %v1263
          %1407 = vmatmul.mubr.bf16.gmra.mrb[0].mxu0 %v1262
          %v1408 = vpop.f32.mrb[0].mxu0
          %v1409 = vadd.f32 0.0, %v1408
          %v1410 = vpop.f32.mrb[0].mxu0
          %v1411 = vpop.f32.mrb[0].mxu0
          %v1412 = vadd.f32 0.0, %v1411
          %v1413 = vpop.f32.mrb[0].mxu0
          %1414 = vmatprep.mubr.bf16.mxu0 %v1265
          %1415 = vmatmul.mubr.bf16.gmra.mrb[0].mxu0 %v1264
          %v1416 = vpop.f32.mrb[0].mxu0
          %v1417 = vadd.f32 0.0, %v1416
          %v1418 = vpop.f32.mrb[0].mxu0
          %v1419 = vpop.f32.mrb[0].mxu0
          %v1420 = vadd.f32 0.0, %v1419
          %v1421 = vpop.f32.mrb[0].mxu0
          %1422 = vmatprep.mubr.bf16.mxu0 %v1267
          %1423 = vmatmul.mubr.bf16.gmra.mrb[0].mxu0 %v1266
          %v1424 = vpop.f32.mrb[0].mxu0
          %v1425 = vadd.f32 0.0, %v1424
          %v1426 = vpop.f32.mrb[0].mxu0
          %v1427 = vpop.f32.mrb[0].mxu0
          %v1428 = vadd.f32 0.0, %v1427
          %v1429 = vpop.f32.mrb[0].mxu0
          %1430 = vmatprep.mubr.bf16.mxu0 %v1269
          %1431 = vmatmul.mubr.bf16.gmra.mrb[0].mxu0 %v1268
          %v1432 = vpop.f32.mrb[0].mxu0
          %v1433 = vadd.f32 0.0, %v1432
          %v1434 = vpop.f32.mrb[0].mxu0
          %v1435 = vpop.f32.mrb[0].mxu0
          %v1436 = vadd.f32 0.0, %v1435
          %v1437 = vpop.f32.mrb[0].mxu0
          %1438 = vmatprep.mubr.bf16.mxu0 %v1271
          %1439 = vmatmul.mubr.bf16.gmra.mrb[0].mxu0 %v1270
          %v1440 = vpop.f32.mrb[0].mxu0
          %v1441 = vadd.f32 0.0, %v1440
          %v1442 = vpop.f32.mrb[0].mxu0
          %v1443 = vpop.f32.mrb[0].mxu0
          %v1444 = vadd.f32 0.0, %v1443
          %v1445 = vpop.f32.mrb[0].mxu0
          %1446 = vmatprep.mubr.bf16.mxu0 %v1273
          %1447 = vmatmul.mubr.bf16.gmra.mrb[0].mxu0 %v1272
          %v1448 = vpop.f32.mrb[0].mxu0
          %v1449 = vadd.f32 0.0, %v1448
          %v1450 = vpop.f32.mrb[0].mxu0
          %v1451 = vpop.f32.mrb[0].mxu0
          %v1452 = vadd.f32 0.0, %v1451
          %v1453 = vpop.f32.mrb[0].mxu0
          %1454 = vmatprep.mubr.bf16.mxu0 %v1275
          %1455 = vmatmul.mubr.bf16.gmra.mrb[0].mxu0 %v1274
          %v1456 = vpop.f32.mrb[0].mxu0
          %v1457 = vadd.f32 0.0, %v1456
          %v1458 = vpop.f32.mrb[0].mxu0
          %v1459 = vpop.f32.mrb[0].mxu0
          %v1460 = vadd.f32 0.0, %v1459
          %v1461 = vpop.f32.mrb[0].mxu0
          %1462 = vmatprep.mubr.bf16.mxu0 %v1277
          %1463 = vmatmul.mubr.bf16.gmra.mrb[0].mxu0 %v1276
          %v1464 = vpop.f32.mrb[0].mxu0
          %v1465 = vadd.f32 0.0, %v1464
          %v1466 = vpop.f32.mrb[0].mxu0
          %v1467 = vpop.f32.mrb[0].mxu0
          %v1468 = vadd.f32 0.0, %v1467
          %v1469 = vpop.f32.mrb[0].mxu0
          %1470 = vdwg.mxu0
          %v1471 = vadd.f32 %v1098, %v1345
          %v1472 = vadd.f32 %v1099, %v1348
          %v1473 = vadd.f32 %v1100, %v1353
          %v1474 = vadd.f32 %v1101, %v1356
          %v1475 = vadd.f32 %v1102, %v1361
          %v1476 = vadd.f32 %v1103, %v1364
          %v1477 = vadd.f32 %v1104, %v1369
          %v1478 = vadd.f32 %v1105, %v1372
          %v1479 = vadd.f32 %v1106, %v1377
          %v1480 = vadd.f32 %v1107, %v1380
          %v1481 = vadd.f32 %v1108, %v1385
          %v1482 = vadd.f32 %v1109, %v1388
          %v1483 = vadd.f32 %v1110, %v1393
          %v1484 = vadd.f32 %v1111, %v1396
          %v1485 = vadd.f32 %v1112, %v1401
          %v1486 = vadd.f32 %v1113, %v1404
          %v1487 = vadd.f32 %v1114, %v1409
          %v1488 = vadd.f32 %v1115, %v1412
          %v1489 = vadd.f32 %v1116, %v1417
          %v1490 = vadd.f32 %v1117, %v1420
          %v1491 = vadd.f32 %v1118, %v1425
          %v1492 = vadd.f32 %v1119, %v1428
          %v1493 = vadd.f32 %v1120, %v1433
          %v1494 = vadd.f32 %v1121, %v1436
          %v1495 = vadd.f32 %v1122, %v1441
          %v1496 = vadd.f32 %v1123, %v1444
          %v1497 = vadd.f32 %v1124, %v1449
          %v1498 = vadd.f32 %v1125, %v1452
          %v1499 = vadd.f32 %v1126, %v1457
          %v1500 = vadd.f32 %v1127, %v1460
          %v1501 = vadd.f32 %v1128, %v1465
          %v1502 = vadd.f32 %v1129, %v1468
          %1503 = vst [vmem:[#allocation4] sm:$0xff] %v1471
          %1504 = vst [vmem:[#allocation4 + $0x8] sm:$0xff] %v1472
          %1505 = vst [vmem:[#allocation4 + $0x10] sm:$0xff] %v1473
          %1506 = vst [vmem:[#allocation4 + $0x18] sm:$0xff] %v1474
          %1507 = vst [vmem:[#allocation4 + $0x20] sm:$0xff] %v1475
          %1508 = vst [vmem:[#allocation4 + $0x28] sm:$0xff] %v1476
          %1509 = vst [vmem:[#allocation4 + $0x30] sm:$0xff] %v1477
          %1510 = vst [vmem:[#allocation4 + $0x38] sm:$0xff] %v1478
          %1511 = vst [vmem:[#allocation4 + $0x40] sm:$0xff] %v1479
          %1512 = vst [vmem:[#allocation4 + $0x48] sm:$0xff] %v1480
          %1513 = vst [vmem:[#allocation4 + $0x50] sm:$0xff] %v1481
          %1514 = vst [vmem:[#allocation4 + $0x58] sm:$0xff] %v1482
          %1515 = vst [vmem:[#allocation4 + $0x60] sm:$0xff] %v1483
          %1516 = vst [vmem:[#allocation4 + $0x68] sm:$0xff] %v1484
          %1517 = vst [vmem:[#allocation4 + $0x70] sm:$0xff] %v1485
          %1518 = vst [vmem:[#allocation4 + $0x78] sm:$0xff] %v1486
          %1519 = vst [vmem:[#allocation4 + $0x80] sm:$0xff] %v1487
          %1520 = vst [vmem:[#allocation4 + $0x88] sm:$0xff] %v1488
          %1521 = vst [vmem:[#allocation4 + $0x90] sm:$0xff] %v1489
          %1522 = vst [vmem:[#allocation4 + $0x98] sm:$0xff] %v1490
          %1523 = vst [vmem:[#allocation4 + $0xa0] sm:$0xff] %v1491
          %1524 = vst [vmem:[#allocation4 + $0xa8] sm:$0xff] %v1492
          %1525 = vst [vmem:[#allocation4 + $0xb0] sm:$0xff] %v1493
          %1526 = vst [vmem:[#allocation4 + $0xb8] sm:$0xff] %v1494
          %1527 = vst [vmem:[#allocation4 + $0xc0] sm:$0xff] %v1495
          %1528 = vst [vmem:[#allocation4 + $0xc8] sm:$0xff] %v1496
          %1529 = vst [vmem:[#allocation4 + $0xd0] sm:$0xff] %v1497
          %1530 = vst [vmem:[#allocation4 + $0xd8] sm:$0xff] %v1498
          %1531 = vst [vmem:[#allocation4 + $0xe0] sm:$0xff] %v1499
          %1532 = vst [vmem:[#allocation4 + $0xe8] sm:$0xff] %v1500
          %1533 = vst [vmem:[#allocation4 + $0xf0] sm:$0xff] %v1501
          %1534 = vst [vmem:[#allocation4 + $0xf8] sm:$0xff] %v1502
        $region72: #{tpu_custom_call.1} parent=43 // pred_fallthru
          _
        %p1535 = scmp.eq.s32.totalorder %s30, 1
        // Predicated region
        $region73: #{tpu_custom_call.1} parent=43 // pred_check
          %p1536 = pneg %p1535
        $region74: #{tpu_custom_call.1} parent=43 // pred_check_branch
          %1538 = sbr.rel (%p1536) target = $region76
        $region75: #{tpu_custom_call.1} parent=43 // pred_region
          %v1539 = vld [vmem:[#allocation4] sm:$0xff]
          %v1540 = vld [vmem:[#allocation4 + $0x8] sm:$0xff]
          %v1541 = vld [vmem:[#allocation4 + $0x10] sm:$0xff]
          %v1542 = vld [vmem:[#allocation4 + $0x18] sm:$0xff]
          %v1543 = vld [vmem:[#allocation4 + $0x20] sm:$0xff]
          %v1544 = vld [vmem:[#allocation4 + $0x28] sm:$0xff]
          %v1545 = vld [vmem:[#allocation4 + $0x30] sm:$0xff]
          %v1546 = vld [vmem:[#allocation4 + $0x38] sm:$0xff]
          %v1547 = vld [vmem:[#allocation4 + $0x40] sm:$0xff]
          %v1548 = vld [vmem:[#allocation4 + $0x48] sm:$0xff]
          %v1549 = vld [vmem:[#allocation4 + $0x50] sm:$0xff]
          %v1550 = vld [vmem:[#allocation4 + $0x58] sm:$0xff]
          %v1551 = vld [vmem:[#allocation4 + $0x60] sm:$0xff]
          %v1552 = vld [vmem:[#allocation4 + $0x68] sm:$0xff]
          %v1553 = vld [vmem:[#allocation4 + $0x70] sm:$0xff]
          %v1554 = vld [vmem:[#allocation4 + $0x78] sm:$0xff]
          %v1555 = vld [vmem:[#allocation4 + $0x80] sm:$0xff]
          %v1556 = vld [vmem:[#allocation4 + $0x88] sm:$0xff]
          %v1557 = vld [vmem:[#allocation4 + $0x90] sm:$0xff]
          %v1558 = vld [vmem:[#allocation4 + $0x98] sm:$0xff]
          %v1559 = vld [vmem:[#allocation4 + $0xa0] sm:$0xff]
          %v1560 = vld [vmem:[#allocation4 + $0xa8] sm:$0xff]
          %v1561 = vld [vmem:[#allocation4 + $0xb0] sm:$0xff]
          %v1562 = vld [vmem:[#allocation4 + $0xb8] sm:$0xff]
          %v1563 = vld [vmem:[#allocation4 + $0xc0] sm:$0xff]
          %v1564 = vld [vmem:[#allocation4 + $0xc8] sm:$0xff]
          %v1565 = vld [vmem:[#allocation4 + $0xd0] sm:$0xff]
          %v1566 = vld [vmem:[#allocation4 + $0xd8] sm:$0xff]
          %v1567 = vld [vmem:[#allocation4 + $0xe0] sm:$0xff]
          %v1568 = vld [vmem:[#allocation4 + $0xe8] sm:$0xff]
          %v1569 = vld [vmem:[#allocation4 + $0xf0] sm:$0xff]
          %v1570 = vld [vmem:[#allocation4 + $0xf8] sm:$0xff]
          %s1571 = sshra.s32 %s1094, 4
          %s1572 = sand.u32 %s1094, 15
          %s1573 = smul.addr %s1571, 8
          %s1574 = scalar_lea.vmem [#allocation3], %s1573
          %v1575 = vld [vmem:[%s1574] sm:$0xff]
          %v1576 = vld [vmem:[%s1574 + $0x8] sm:$0xff]
          %v1577 = vld [vmem:[%s1574 + $0x10] sm:$0xff]
          %v1578 = vld [vmem:[%s1574 + $0x18] sm:$0xff]
          %v1579 = vld [vmem:[%s1574 + $0x20] sm:$0xff]
          %v1580 = vld [vmem:[%s1574 + $0x28] sm:$0xff]
          %v1581 = vld [vmem:[%s1574 + $0x30] sm:$0xff]
          %v1582 = vld [vmem:[%s1574 + $0x38] sm:$0xff]
          %v1583 = vld [vmem:[%s1574 + $0x40] sm:$0xff]
          %v1584 = vld [vmem:[%s1574 + $0x48] sm:$0xff]
          %v1585 = vld [vmem:[%s1574 + $0x50] sm:$0xff]
          %v1586 = vld [vmem:[%s1574 + $0x58] sm:$0xff]
          %v1587 = vld [vmem:[%s1574 + $0x60] sm:$0xff]
          %v1588 = vld [vmem:[%s1574 + $0x68] sm:$0xff]
          %v1589 = vld [vmem:[%s1574 + $0x70] sm:$0xff]
          %v1590 = vld [vmem:[%s1574 + $0x78] sm:$0xff]
          %v1623 = vunpack.c.l.b16 %v1062
          %v1624 = vunpack.c.h.b16 %v1062
          %v1625 = vunpack.c.l.b16 %v1063
          %v1626 = vunpack.c.h.b16 %v1063
          %v1627 = vunpack.c.l.b16 %v1064
          %v1628 = vunpack.c.h.b16 %v1064
          %v1629 = vunpack.c.l.b16 %v1065
          %v1630 = vunpack.c.h.b16 %v1065
          %v1631 = vunpack.c.l.b16 %v1066
          %v1632 = vunpack.c.h.b16 %v1066
          %v1633 = vunpack.c.l.b16 %v1067
          %v1634 = vunpack.c.h.b16 %v1067
          %v1635 = vunpack.c.l.b16 %v1068
          %v1636 = vunpack.c.h.b16 %v1068
          %v1637 = vunpack.c.l.b16 %v1069
          %v1638 = vunpack.c.h.b16 %v1069
          %v1639 = vunpack.c.l.b16 %v1070
          %v1640 = vunpack.c.h.b16 %v1070
          %v1641 = vunpack.c.l.b16 %v1071
          %v1642 = vunpack.c.h.b16 %v1071
          %v1643 = vunpack.c.l.b16 %v1072
          %v1644 = vunpack.c.h.b16 %v1072
          %v1645 = vunpack.c.l.b16 %v1073
          %v1646 = vunpack.c.h.b16 %v1073
          %v1647 = vunpack.c.l.b16 %v1074
          %v1648 = vunpack.c.h.b16 %v1074
          %v1649 = vunpack.c.l.b16 %v1075
          %v1650 = vunpack.c.h.b16 %v1075
          %v1651 = vunpack.c.l.b16 %v1076
          %v1652 = vunpack.c.h.b16 %v1076
          %v1653 = vunpack.c.l.b16 %v1077
          %v1654 = vunpack.c.h.b16 %v1077
          %v1655 = vunpack.c.l.b16 %v1078
          %v1656 = vunpack.c.h.b16 %v1078
          %v1657 = vunpack.c.l.b16 %v1079
          %v1658 = vunpack.c.h.b16 %v1079
          %v1659 = vunpack.c.l.b16 %v1080
          %v1660 = vunpack.c.h.b16 %v1080
          %v1661 = vunpack.c.l.b16 %v1081
          %v1662 = vunpack.c.h.b16 %v1081
          %v1663 = vunpack.c.l.b16 %v1082
          %v1664 = vunpack.c.h.b16 %v1082
          %v1665 = vunpack.c.l.b16 %v1083
          %v1666 = vunpack.c.h.b16 %v1083
          %v1667 = vunpack.c.l.b16 %v1084
          %v1668 = vunpack.c.h.b16 %v1084
          %v1669 = vunpack.c.l.b16 %v1085
          %v1670 = vunpack.c.h.b16 %v1085
          %v1671 = vunpack.c.l.b16 %v1086
          %v1672 = vunpack.c.h.b16 %v1086
          %v1673 = vunpack.c.l.b16 %v1087
          %v1674 = vunpack.c.h.b16 %v1087
          %v1675 = vunpack.c.l.b16 %v1088
          %v1676 = vunpack.c.h.b16 %v1088
          %v1677 = vunpack.c.l.b16 %v1089
          %v1678 = vunpack.c.h.b16 %v1089
          %v1679 = vunpack.c.l.b16 %v1090
          %v1680 = vunpack.c.h.b16 %v1090
          %v1681 = vunpack.c.l.b16 %v1091
          %v1682 = vunpack.c.h.b16 %v1091
          %v1683 = vunpack.c.l.b16 %v1092
          %v1684 = vunpack.c.h.b16 %v1092
          %v1685 = vunpack.c.l.b16 %v1093
          %v1686 = vunpack.c.h.b16 %v1093
          %v1687 = vpack.c.b16 %v1625, %v1623
          %v1688 = vpack.c.b16 %v1626, %v1624
          %v1689 = vpack.c.b16 %v1629, %v1627
          %v1690 = vpack.c.b16 %v1630, %v1628
          %v1691 = vpack.c.b16 %v1633, %v1631
          %v1692 = vpack.c.b16 %v1634, %v1632
          %v1693 = vpack.c.b16 %v1637, %v1635
          %v1694 = vpack.c.b16 %v1638, %v1636
          %v1695 = vpack.c.b16 %v1641, %v1639
          %v1696 = vpack.c.b16 %v1642, %v1640
          %v1697 = vpack.c.b16 %v1645, %v1643
          %v1698 = vpack.c.b16 %v1646, %v1644
          %v1699 = vpack.c.b16 %v1649, %v1647
          %v1700 = vpack.c.b16 %v1650, %v1648
          %v1701 = vpack.c.b16 %v1653, %v1651
          %v1702 = vpack.c.b16 %v1654, %v1652
          %v1703 = vpack.c.b16 %v1657, %v1655
          %v1704 = vpack.c.b16 %v1658, %v1656
          %v1705 = vpack.c.b16 %v1661, %v1659
          %v1706 = vpack.c.b16 %v1662, %v1660
          %v1707 = vpack.c.b16 %v1665, %v1663
          %v1708 = vpack.c.b16 %v1666, %v1664
          %v1709 = vpack.c.b16 %v1669, %v1667
          %v1710 = vpack.c.b16 %v1670, %v1668
          %v1711 = vpack.c.b16 %v1673, %v1671
          %v1712 = vpack.c.b16 %v1674, %v1672
          %v1713 = vpack.c.b16 %v1677, %v1675
          %v1714 = vpack.c.b16 %v1678, %v1676
          %v1715 = vpack.c.b16 %v1681, %v1679
          %v1716 = vpack.c.b16 %v1682, %v1680
          %v1717 = vpack.c.b16 %v1685, %v1683
          %v1718 = vpack.c.b16 %v1686, %v1684
          %1751 = vmatprep.subr.bf16.mxu0 0
          %1752 = vmatpush1.bf16.msra.mxu0 %v1575
          %1753 = vmatprep.subr.bf16.mxu0 0
          %1754 = vmatpush1.bf16.msra.mxu0 %v1576
          %1755 = vmatprep.subr.bf16.mxu0 0
          %1756 = vmatpush1.bf16.msra.mxu0 %v1577
          %1757 = vmatprep.subr.bf16.mxu0 0
          %1758 = vmatpush1.bf16.msra.mxu0 %v1578
          %1759 = vmatprep.subr.bf16.mxu0 0
          %1760 = vmatpush1.bf16.msra.mxu0 %v1579
          %1761 = vmatprep.subr.bf16.mxu0 0
          %1762 = vmatpush1.bf16.msra.mxu0 %v1580
          %1763 = vmatprep.subr.bf16.mxu0 0
          %1764 = vmatpush1.bf16.msra.mxu0 %v1581
          %1765 = vmatprep.subr.bf16.mxu0 0
          %1766 = vmatpush1.bf16.msra.mxu0 %v1582
          %1767 = vmatprep.subr.bf16.mxu0 0
          %1768 = vmatpush1.bf16.msra.mxu0 %v1583
          %1769 = vmatprep.subr.bf16.mxu0 0
          %1770 = vmatpush1.bf16.msra.mxu0 %v1584
          %1771 = vmatprep.subr.bf16.mxu0 0
          %1772 = vmatpush1.bf16.msra.mxu0 %v1585
          %1773 = vmatprep.subr.bf16.mxu0 0
          %1774 = vmatpush1.bf16.msra.mxu0 %v1586
          %1775 = vmatprep.subr.bf16.mxu0 0
          %1776 = vmatpush1.bf16.msra.mxu0 %v1587
          %1777 = vmatprep.subr.bf16.mxu0 0
          %1778 = vmatpush1.bf16.msra.mxu0 %v1588
          %1779 = vmatprep.subr.bf16.mxu0 0
          %1780 = vmatpush1.bf16.msra.mxu0 %v1589
          %1781 = vmatprep.subr.bf16.mxu0 0
          %1782 = vmatpush1.bf16.msra.mxu0 %v1590
          %1783 = vmatprep.mubr.bf16.mxu0 %v1688
          %1784 = vmatmul.mubr.bf16.gmra.mrb[0].mxu0 %v1687
          %v1785 = vpop.f32.mrb[0].mxu0
          %v1786 = vadd.f32 0.0, %v1785
          %v1787 = vpop.f32.mrb[0].mxu0
          %v1788 = vpop.f32.mrb[0].mxu0
          %v1789 = vadd.f32 0.0, %v1788
          %v1790 = vpop.f32.mrb[0].mxu0
          %1791 = vmatprep.mubr.bf16.mxu0 %v1690
          %1792 = vmatmul.mubr.bf16.gmra.mrb[0].mxu0 %v1689
          %v1793 = vpop.f32.mrb[0].mxu0
          %v1794 = vadd.f32 0.0, %v1793
          %v1795 = vpop.f32.mrb[0].mxu0
          %v1796 = vpop.f32.mrb[0].mxu0
          %v1797 = vadd.f32 0.0, %v1796
          %v1798 = vpop.f32.mrb[0].mxu0
          %1799 = vmatprep.mubr.bf16.mxu0 %v1692
          %1800 = vmatmul.mubr.bf16.gmra.mrb[0].mxu0 %v1691
          %v1801 = vpop.f32.mrb[0].mxu0
          %v1802 = vadd.f32 0.0, %v1801
          %v1803 = vpop.f32.mrb[0].mxu0
          %v1804 = vpop.f32.mrb[0].mxu0
          %v1805 = vadd.f32 0.0, %v1804
          %v1806 = vpop.f32.mrb[0].mxu0
          %1807 = vmatprep.mubr.bf16.mxu0 %v1694
          %1808 = vmatmul.mubr.bf16.gmra.mrb[0].mxu0 %v1693
          %v1809 = vpop.f32.mrb[0].mxu0
          %v1810 = vadd.f32 0.0, %v1809
          %v1811 = vpop.f32.mrb[0].mxu0
          %v1812 = vpop.f32.mrb[0].mxu0
          %v1813 = vadd.f32 0.0, %v1812
          %v1814 = vpop.f32.mrb[0].mxu0
          %1815 = vmatprep.mubr.bf16.mxu0 %v1696
          %1816 = vmatmul.mubr.bf16.gmra.mrb[0].mxu0 %v1695
          %v1817 = vpop.f32.mrb[0].mxu0
          %v1818 = vadd.f32 0.0, %v1817
          %v1819 = vpop.f32.mrb[0].mxu0
          %v1820 = vpop.f32.mrb[0].mxu0
          %v1821 = vadd.f32 0.0, %v1820
          %v1822 = vpop.f32.mrb[0].mxu0
          %1823 = vmatprep.mubr.bf16.mxu0 %v1698
          %1824 = vmatmul.mubr.bf16.gmra.mrb[0].mxu0 %v1697
          %v1825 = vpop.f32.mrb[0].mxu0
          %v1826 = vadd.f32 0.0, %v1825
          %v1827 = vpop.f32.mrb[0].mxu0
          %v1828 = vpop.f32.mrb[0].mxu0
          %v1829 = vadd.f32 0.0, %v1828
          %v1830 = vpop.f32.mrb[0].mxu0
          %1831 = vmatprep.mubr.bf16.mxu0 %v1700
          %1832 = vmatmul.mubr.bf16.gmra.mrb[0].mxu0 %v1699
          %v1833 = vpop.f32.mrb[0].mxu0
          %v1834 = vadd.f32 0.0, %v1833
          %v1835 = vpop.f32.mrb[0].mxu0
          %v1836 = vpop.f32.mrb[0].mxu0
          %v1837 = vadd.f32 0.0, %v1836
          %v1838 = vpop.f32.mrb[0].mxu0
          %1839 = vmatprep.mubr.bf16.mxu0 %v1702
          %1840 = vmatmul.mubr.bf16.gmra.mrb[0].mxu0 %v1701
          %v1841 = vpop.f32.mrb[0].mxu0
          %v1842 = vadd.f32 0.0, %v1841
          %v1843 = vpop.f32.mrb[0].mxu0
          %v1844 = vpop.f32.mrb[0].mxu0
          %v1845 = vadd.f32 0.0, %v1844
          %v1846 = vpop.f32.mrb[0].mxu0
          %1847 = vmatprep.mubr.bf16.mxu0 %v1704
          %1848 = vmatmul.mubr.bf16.gmra.mrb[0].mxu0 %v1703
          %v1849 = vpop.f32.mrb[0].mxu0
          %v1850 = vadd.f32 0.0, %v1849
          %v1851 = vpop.f32.mrb[0].mxu0
          %v1852 = vpop.f32.mrb[0].mxu0
          %v1853 = vadd.f32 0.0, %v1852
          %v1854 = vpop.f32.mrb[0].mxu0
          %1855 = vmatprep.mubr.bf16.mxu0 %v1706
          %1856 = vmatmul.mubr.bf16.gmra.mrb[0].mxu0 %v1705
          %v1857 = vpop.f32.mrb[0].mxu0
          %v1858 = vadd.f32 0.0, %v1857
          %v1859 = vpop.f32.mrb[0].mxu0
          %v1860 = vpop.f32.mrb[0].mxu0
          %v1861 = vadd.f32 0.0, %v1860
          %v1862 = vpop.f32.mrb[0].mxu0
          %1863 = vmatprep.mubr.bf16.mxu0 %v1708
          %1864 = vmatmul.mubr.bf16.gmra.mrb[0].mxu0 %v1707
          %v1865 = vpop.f32.mrb[0].mxu0
          %v1866 = vadd.f32 0.0, %v1865
          %v1867 = vpop.f32.mrb[0].mxu0
          %v1868 = vpop.f32.mrb[0].mxu0
          %v1869 = vadd.f32 0.0, %v1868
          %v1870 = vpop.f32.mrb[0].mxu0
          %1871 = vmatprep.mubr.bf16.mxu0 %v1710
          %1872 = vmatmul.mubr.bf16.gmra.mrb[0].mxu0 %v1709
          %v1873 = vpop.f32.mrb[0].mxu0
          %v1874 = vadd.f32 0.0, %v1873
          %v1875 = vpop.f32.mrb[0].mxu0
          %v1876 = vpop.f32.mrb[0].mxu0
          %v1877 = vadd.f32 0.0, %v1876
          %v1878 = vpop.f32.mrb[0].mxu0
          %1879 = vmatprep.mubr.bf16.mxu0 %v1712
          %1880 = vmatmul.mubr.bf16.gmra.mrb[0].mxu0 %v1711
          %v1881 = vpop.f32.mrb[0].mxu0
          %v1882 = vadd.f32 0.0, %v1881
          %v1883 = vpop.f32.mrb[0].mxu0
          %v1884 = vpop.f32.mrb[0].mxu0
          %v1885 = vadd.f32 0.0, %v1884
          %v1886 = vpop.f32.mrb[0].mxu0
          %1887 = vmatprep.mubr.bf16.mxu0 %v1714
          %1888 = vmatmul.mubr.bf16.gmra.mrb[0].mxu0 %v1713
          %v1889 = vpop.f32.mrb[0].mxu0
          %v1890 = vadd.f32 0.0, %v1889
          %v1891 = vpop.f32.mrb[0].mxu0
          %v1892 = vpop.f32.mrb[0].mxu0
          %v1893 = vadd.f32 0.0, %v1892
          %v1894 = vpop.f32.mrb[0].mxu0
          %1895 = vmatprep.mubr.bf16.mxu0 %v1716
          %1896 = vmatmul.mubr.bf16.gmra.mrb[0].mxu0 %v1715
          %v1897 = vpop.f32.mrb[0].mxu0
          %v1898 = vadd.f32 0.0, %v1897
          %v1899 = vpop.f32.mrb[0].mxu0
          %v1900 = vpop.f32.mrb[0].mxu0
          %v1901 = vadd.f32 0.0, %v1900
          %v1902 = vpop.f32.mrb[0].mxu0
          %1903 = vmatprep.mubr.bf16.mxu0 %v1718
          %1904 = vmatmul.mubr.bf16.gmra.mrb[0].mxu0 %v1717
          %v1905 = vpop.f32.mrb[0].mxu0
          %v1906 = vadd.f32 0.0, %v1905
          %v1907 = vpop.f32.mrb[0].mxu0
          %v1908 = vpop.f32.mrb[0].mxu0
          %v1909 = vadd.f32 0.0, %v1908
          %v1910 = vpop.f32.mrb[0].mxu0
          %1911 = vdwg.mxu0
          %v1912 = vadd.f32 %v1539, %v1786
          %v1913 = vadd.f32 %v1540, %v1789
          %v1914 = vadd.f32 %v1541, %v1794
          %v1915 = vadd.f32 %v1542, %v1797
          %v1916 = vadd.f32 %v1543, %v1802
          %v1917 = vadd.f32 %v1544, %v1805
          %v1918 = vadd.f32 %v1545, %v1810
          %v1919 = vadd.f32 %v1546, %v1813
          %v1920 = vadd.f32 %v1547, %v1818
          %v1921 = vadd.f32 %v1548, %v1821
          %v1922 = vadd.f32 %v1549, %v1826
          %v1923 = vadd.f32 %v1550, %v1829
          %v1924 = vadd.f32 %v1551, %v1834
          %v1925 = vadd.f32 %v1552, %v1837
          %v1926 = vadd.f32 %v1553, %v1842
          %v1927 = vadd.f32 %v1554, %v1845
          %v1928 = vadd.f32 %v1555, %v1850
          %v1929 = vadd.f32 %v1556, %v1853
          %v1930 = vadd.f32 %v1557, %v1858
          %v1931 = vadd.f32 %v1558, %v1861
          %v1932 = vadd.f32 %v1559, %v1866
          %v1933 = vadd.f32 %v1560, %v1869
          %v1934 = vadd.f32 %v1561, %v1874
          %v1935 = vadd.f32 %v1562, %v1877
          %v1936 = vadd.f32 %v1563, %v1882
          %v1937 = vadd.f32 %v1564, %v1885
          %v1938 = vadd.f32 %v1565, %v1890
          %v1939 = vadd.f32 %v1566, %v1893
          %v1940 = vadd.f32 %v1567, %v1898
          %v1941 = vadd.f32 %v1568, %v1901
          %v1942 = vadd.f32 %v1569, %v1906
          %v1943 = vadd.f32 %v1570, %v1909
          %1944 = vst [vmem:[#allocation4] sm:$0xff] %v1912
          %1945 = vst [vmem:[#allocation4 + $0x8] sm:$0xff] %v1913
          %1946 = vst [vmem:[#allocation4 + $0x10] sm:$0xff] %v1914
          %1947 = vst [vmem:[#allocation4 + $0x18] sm:$0xff] %v1915
          %1948 = vst [vmem:[#allocation4 + $0x20] sm:$0xff] %v1916
          %1949 = vst [vmem:[#allocation4 + $0x28] sm:$0xff] %v1917
          %1950 = vst [vmem:[#allocation4 + $0x30] sm:$0xff] %v1918
          %1951 = vst [vmem:[#allocation4 + $0x38] sm:$0xff] %v1919
          %1952 = vst [vmem:[#allocation4 + $0x40] sm:$0xff] %v1920
          %1953 = vst [vmem:[#allocation4 + $0x48] sm:$0xff] %v1921
          %1954 = vst [vmem:[#allocation4 + $0x50] sm:$0xff] %v1922
          %1955 = vst [vmem:[#allocation4 + $0x58] sm:$0xff] %v1923
          %1956 = vst [vmem:[#allocation4 + $0x60] sm:$0xff] %v1924
          %1957 = vst [vmem:[#allocation4 + $0x68] sm:$0xff] %v1925
          %1958 = vst [vmem:[#allocation4 + $0x70] sm:$0xff] %v1926
          %1959 = vst [vmem:[#allocation4 + $0x78] sm:$0xff] %v1927
          %1960 = vst [vmem:[#allocation4 + $0x80] sm:$0xff] %v1928
          %1961 = vst [vmem:[#allocation4 + $0x88] sm:$0xff] %v1929
          %1962 = vst [vmem:[#allocation4 + $0x90] sm:$0xff] %v1930
          %1963 = vst [vmem:[#allocation4 + $0x98] sm:$0xff] %v1931
          %1964 = vst [vmem:[#allocation4 + $0xa0] sm:$0xff] %v1932
          %1965 = vst [vmem:[#allocation4 + $0xa8] sm:$0xff] %v1933
          %1966 = vst [vmem:[#allocation4 + $0xb0] sm:$0xff] %v1934
          %1967 = vst [vmem:[#allocation4 + $0xb8] sm:$0xff] %v1935
          %1968 = vst [vmem:[#allocation4 + $0xc0] sm:$0xff] %v1936
          %1969 = vst [vmem:[#allocation4 + $0xc8] sm:$0xff] %v1937
          %1970 = vst [vmem:[#allocation4 + $0xd0] sm:$0xff] %v1938
          %1971 = vst [vmem:[#allocation4 + $0xd8] sm:$0xff] %v1939
          %1972 = vst [vmem:[#allocation4 + $0xe0] sm:$0xff] %v1940
          %1973 = vst [vmem:[#allocation4 + $0xe8] sm:$0xff] %v1941
          %1974 = vst [vmem:[#allocation4 + $0xf0] sm:$0xff] %v1942
          %1975 = vst [vmem:[#allocation4 + $0xf8] sm:$0xff] %v1943
        $region76: #{tpu_custom_call.1} parent=43 // pred_fallthru
          _
        %p1976 = scmp.eq.s32.totalorder %s32, 1
        %p1977 = pnand %p345, %p1976
        %p1978 = pneg %p1977
        // Predicated region
        $region77: #{tpu_custom_call.1} parent=43 // pred_check
          _
        $region78: #{tpu_custom_call.1} parent=43 // pred_check_branch
          %1980 = sbr.rel (%p1977) target = $region80
        $region79: #{tpu_custom_call.1} parent=43 // pred_region
          %v1981 = vld [vmem:[#allocation4] sm:$0xff]
          %v1982 = vld [vmem:[#allocation4 + $0x8] sm:$0xff]
          %v1983 = vld [vmem:[#allocation4 + $0x10] sm:$0xff]
          %v1984 = vld [vmem:[#allocation4 + $0x18] sm:$0xff]
          %v1985 = vld [vmem:[#allocation4 + $0x20] sm:$0xff]
          %v1986 = vld [vmem:[#allocation4 + $0x28] sm:$0xff]
          %v1987 = vld [vmem:[#allocation4 + $0x30] sm:$0xff]
          %v1988 = vld [vmem:[#allocation4 + $0x38] sm:$0xff]
          %v1989 = vld [vmem:[#allocation4 + $0x40] sm:$0xff]
          %v1990 = vld [vmem:[#allocation4 + $0x48] sm:$0xff]
          %v1991 = vld [vmem:[#allocation4 + $0x50] sm:$0xff]
          %v1992 = vld [vmem:[#allocation4 + $0x58] sm:$0xff]
          %v1993 = vld [vmem:[#allocation4 + $0x60] sm:$0xff]
          %v1994 = vld [vmem:[#allocation4 + $0x68] sm:$0xff]
          %v1995 = vld [vmem:[#allocation4 + $0x70] sm:$0xff]
          %v1996 = vld [vmem:[#allocation4 + $0x78] sm:$0xff]
          %v1997 = vld [vmem:[#allocation4 + $0x80] sm:$0xff]
          %v1998 = vld [vmem:[#allocation4 + $0x88] sm:$0xff]
          %v1999 = vld [vmem:[#allocation4 + $0x90] sm:$0xff]
          %v2000 = vld [vmem:[#allocation4 + $0x98] sm:$0xff]
          %v2001 = vld [vmem:[#allocation4 + $0xa0] sm:$0xff]
          %v2002 = vld [vmem:[#allocation4 + $0xa8] sm:$0xff]
          %v2003 = vld [vmem:[#allocation4 + $0xb0] sm:$0xff]
          %v2004 = vld [vmem:[#allocation4 + $0xb8] sm:$0xff]
          %v2005 = vld [vmem:[#allocation4 + $0xc0] sm:$0xff]
          %v2006 = vld [vmem:[#allocation4 + $0xc8] sm:$0xff]
          %v2007 = vld [vmem:[#allocation4 + $0xd0] sm:$0xff]
          %v2008 = vld [vmem:[#allocation4 + $0xd8] sm:$0xff]
          %v2009 = vld [vmem:[#allocation4 + $0xe0] sm:$0xff]
          %v2010 = vld [vmem:[#allocation4 + $0xe8] sm:$0xff]
          %v2011 = vld [vmem:[#allocation4 + $0xf0] sm:$0xff]
          %v2012 = vld [vmem:[#allocation4 + $0xf8] sm:$0xff]
          %v2013 = vld [vmem:[%s3] sm:$0x1]
          %v2015 = vlaneseq
          %v2016 = vshrl.u32 %v2015, 7
          %v2017 = vsub.s32 0, %v2016
          %v2018 = vrot.slane %v2013, %v2017
          %v2020 = vadd.f32 %v1981, %v2018
          %v2021 = vadd.f32 %v1982, %v2018
          %v2022 = vadd.f32 %v1983, %v2018
          %v2023 = vadd.f32 %v1984, %v2018
          %v2024 = vadd.f32 %v1985, %v2018
          %v2025 = vadd.f32 %v1986, %v2018
          %v2026 = vadd.f32 %v1987, %v2018
          %v2027 = vadd.f32 %v1988, %v2018
          %v2028 = vadd.f32 %v1989, %v2018
          %v2029 = vadd.f32 %v1990, %v2018
          %v2030 = vadd.f32 %v1991, %v2018
          %v2031 = vadd.f32 %v1992, %v2018
          %v2032 = vadd.f32 %v1993, %v2018
          %v2033 = vadd.f32 %v1994, %v2018
          %v2034 = vadd.f32 %v1995, %v2018
          %v2035 = vadd.f32 %v1996, %v2018
          %v2036 = vadd.f32 %v1997, %v2018
          %v2037 = vadd.f32 %v1998, %v2018
          %v2038 = vadd.f32 %v1999, %v2018
          %v2039 = vadd.f32 %v2000, %v2018
          %v2040 = vadd.f32 %v2001, %v2018
          %v2041 = vadd.f32 %v2002, %v2018
          %v2042 = vadd.f32 %v2003, %v2018
          %v2043 = vadd.f32 %v2004, %v2018
          %v2044 = vadd.f32 %v2005, %v2018
          %v2045 = vadd.f32 %v2006, %v2018
          %v2046 = vadd.f32 %v2007, %v2018
          %v2047 = vadd.f32 %v2008, %v2018
          %v2048 = vadd.f32 %v2009, %v2018
          %v2049 = vadd.f32 %v2010, %v2018
          %v2050 = vadd.f32 %v2011, %v2018
          %v2051 = vadd.f32 %v2012, %v2018
          %v2052 = vmax.f32 %v2020, 0.0
          %v2053 = vmax.f32 %v2021, 0.0
          %v2054 = vmax.f32 %v2022, 0.0
          %v2055 = vmax.f32 %v2023, 0.0
          %v2056 = vmax.f32 %v2024, 0.0
          %v2057 = vmax.f32 %v2025, 0.0
          %v2058 = vmax.f32 %v2026, 0.0
          %v2059 = vmax.f32 %v2027, 0.0
          %v2060 = vmax.f32 %v2028, 0.0
          %v2061 = vmax.f32 %v2029, 0.0
          %v2062 = vmax.f32 %v2030, 0.0
          %v2063 = vmax.f32 %v2031, 0.0
          %v2064 = vmax.f32 %v2032, 0.0
          %v2065 = vmax.f32 %v2033, 0.0
          %v2066 = vmax.f32 %v2034, 0.0
          %v2067 = vmax.f32 %v2035, 0.0
          %v2068 = vmax.f32 %v2036, 0.0
          %v2069 = vmax.f32 %v2037, 0.0
          %v2070 = vmax.f32 %v2038, 0.0
          %v2071 = vmax.f32 %v2039, 0.0
          %v2072 = vmax.f32 %v2040, 0.0
          %v2073 = vmax.f32 %v2041, 0.0
          %v2074 = vmax.f32 %v2042, 0.0
          %v2075 = vmax.f32 %v2043, 0.0
          %v2076 = vmax.f32 %v2044, 0.0
          %v2077 = vmax.f32 %v2045, 0.0
          %v2078 = vmax.f32 %v2046, 0.0
          %v2079 = vmax.f32 %v2047, 0.0
          %v2080 = vmax.f32 %v2048, 0.0
          %v2081 = vmax.f32 %v2049, 0.0
          %v2082 = vmax.f32 %v2050, 0.0
          %v2083 = vmax.f32 %v2051, 0.0
          %s2084 = smul.u32 %s31, 256
          %v2085 = vpack.c.bf16 %v2053, %v2052
          %v2086 = vpack.c.bf16 %v2055, %v2054
          %v2087 = vpack.c.bf16 %v2057, %v2056
          %v2088 = vpack.c.bf16 %v2059, %v2058
          %v2089 = vpack.c.bf16 %v2061, %v2060
          %v2090 = vpack.c.bf16 %v2063, %v2062
          %v2091 = vpack.c.bf16 %v2065, %v2064
          %v2092 = vpack.c.bf16 %v2067, %v2066
          %v2093 = vpack.c.bf16 %v2069, %v2068
          %v2094 = vpack.c.bf16 %v2071, %v2070
          %v2095 = vpack.c.bf16 %v2073, %v2072
          %v2096 = vpack.c.bf16 %v2075, %v2074
          %v2097 = vpack.c.bf16 %v2077, %v2076
          %v2098 = vpack.c.bf16 %v2079, %v2078
          %v2099 = vpack.c.bf16 %v2081, %v2080
          %v2100 = vpack.c.bf16 %v2083, %v2082
          %v2101 = vld [vmem:[#allocation11] sm:$0xf]
          %v2102 = vld [vmem:[#allocation11 + $0x4] sm:$0xf]
          %v2103 = vld [vmem:[#allocation11 + $0x8] sm:$0xf]
          %v2104 = vld [vmem:[#allocation11 + $0xc] sm:$0xf]
          %v2105 = vld [vmem:[#allocation11 + $0x10] sm:$0xf]
          %v2106 = vld [vmem:[#allocation11 + $0x14] sm:$0xf]
          %v2107 = vld [vmem:[#allocation11 + $0x18] sm:$0xf]
          %v2108 = vld [vmem:[#allocation11 + $0x1c] sm:$0xf]
          %v2109 = vld [vmem:[#allocation11 + $0x20] sm:$0xf]
          %v2110 = vld [vmem:[#allocation11 + $0x24] sm:$0xf]
          %v2111 = vld [vmem:[#allocation11 + $0x28] sm:$0xf]
          %v2112 = vld [vmem:[#allocation11 + $0x2c] sm:$0xf]
          %v2113 = vld [vmem:[#allocation11 + $0x30] sm:$0xf]
          %v2114 = vld [vmem:[#allocation11 + $0x34] sm:$0xf]
          %v2115 = vld [vmem:[#allocation11 + $0x38] sm:$0xf]
          %v2116 = vld [vmem:[#allocation11 + $0x3c] sm:$0xf]
          %v2133 = vunpack.c.l.b16 %v2101
          %v2134 = vunpack.c.l.b16 %v2102
          %v2135 = vunpack.c.l.b16 %v2103
          %v2136 = vunpack.c.l.b16 %v2104
          %v2137 = vunpack.c.l.b16 %v2105
          %v2138 = vunpack.c.l.b16 %v2106
          %v2139 = vunpack.c.l.b16 %v2107
          %v2140 = vunpack.c.l.b16 %v2108
          %v2141 = vunpack.c.l.b16 %v2109
          %v2142 = vunpack.c.l.b16 %v2110
          %v2143 = vunpack.c.l.b16 %v2111
          %v2144 = vunpack.c.l.b16 %v2112
          %v2145 = vunpack.c.l.b16 %v2113
          %v2146 = vunpack.c.l.b16 %v2114
          %v2147 = vunpack.c.l.b16 %v2115
          %v2148 = vunpack.c.l.b16 %v2116
          %v2149 = vpack.c.b16 %v2134, %v2133
          %v2150 = vpack.c.b16 %v2136, %v2135
          %v2151 = vpack.c.b16 %v2138, %v2137
          %v2152 = vpack.c.b16 %v2140, %v2139
          %v2153 = vpack.c.b16 %v2142, %v2141
          %v2154 = vpack.c.b16 %v2144, %v2143
          %v2155 = vpack.c.b16 %v2146, %v2145
          %v2156 = vpack.c.b16 %v2148, %v2147
          %2165 = vmatprep.subr.bf16.mxu0 0
          %2166 = vmatpush1.bf16.msra.mxu0 %v2149
          %2167 = vmatprep.subr.bf16.mxu0 0
          %2168 = vmatpush1.bf16.msra.mxu0 %v2150
          %2169 = vmatprep.subr.bf16.mxu0 0
          %2170 = vmatpush1.bf16.msra.mxu0 %v2151
          %2171 = vmatprep.subr.bf16.mxu0 0
          %2172 = vmatpush1.bf16.msra.mxu0 %v2152
          %2173 = vmatprep.subr.bf16.mxu0 0
          %2174 = vmatpush1.bf16.msra.mxu0 %v2153
          %2175 = vmatprep.subr.bf16.mxu0 0
          %2176 = vmatpush1.bf16.msra.mxu0 %v2154
          %2177 = vmatprep.subr.bf16.mxu0 0
          %2178 = vmatpush1.bf16.msra.mxu0 %v2155
          %2179 = vmatprep.subr.bf16.mxu0 0
          %2180 = vmatpush1.bf16.msra.mxu0 %v2156
          %2181 = vmatprep.subr.bf16.mxu0 0
          %2182 = vmatpush1.bf16.msra.mxu0 0
          %2183 = vmatprep.subr.bf16.mxu0 0
          %2184 = vmatpush1.bf16.msra.mxu0 0
          %2185 = vmatprep.subr.bf16.mxu0 0
          %2186 = vmatpush1.bf16.msra.mxu0 0
          %2187 = vmatprep.subr.bf16.mxu0 0
          %2188 = vmatpush1.bf16.msra.mxu0 0
          %2189 = vmatprep.subr.bf16.mxu0 0
          %2190 = vmatpush1.bf16.msra.mxu0 0
          %2191 = vmatprep.subr.bf16.mxu0 0
          %2192 = vmatpush1.bf16.msra.mxu0 0
          %2193 = vmatprep.subr.bf16.mxu0 0
          %2194 = vmatpush1.bf16.msra.mxu0 0
          %2195 = vmatprep.subr.bf16.mxu0 0
          %2196 = vmatpush1.bf16.msra.mxu0 0
          %2197 = vmatprep.mubr.bf16.mxu0 0
          %2198 = vmatmul.mubr.bf16.gmra.mrb[0].mxu0 %v2085
          %v2199 = vpop.f32.mrb[0].mxu0
          %v2200 = vadd.f32 0.0, %v2199
          %v2201 = vpop.f32.mrb[0].mxu0
          %v2202 = vpop.f32.mrb[0].mxu0
          %v2203 = vadd.f32 0.0, %v2202
          %v2204 = vpop.f32.mrb[0].mxu0
          %2205 = vmatprep.mubr.bf16.mxu0 0
          %2206 = vmatmul.mubr.bf16.gmra.mrb[0].mxu0 %v2086
          %v2207 = vpop.f32.mrb[0].mxu0
          %v2208 = vadd.f32 0.0, %v2207
          %v2209 = vpop.f32.mrb[0].mxu0
          %v2210 = vpop.f32.mrb[0].mxu0
          %v2211 = vadd.f32 0.0, %v2210
          %v2212 = vpop.f32.mrb[0].mxu0
          %2213 = vmatprep.mubr.bf16.mxu0 0
          %2214 = vmatmul.mubr.bf16.gmra.mrb[0].mxu0 %v2087
          %v2215 = vpop.f32.mrb[0].mxu0
          %v2216 = vadd.f32 0.0, %v2215
          %v2217 = vpop.f32.mrb[0].mxu0
          %v2218 = vpop.f32.mrb[0].mxu0
          %v2219 = vadd.f32 0.0, %v2218
          %v2220 = vpop.f32.mrb[0].mxu0
          %2221 = vmatprep.mubr.bf16.mxu0 0
          %2222 = vmatmul.mubr.bf16.gmra.mrb[0].mxu0 %v2088
          %v2223 = vpop.f32.mrb[0].mxu0
          %v2224 = vadd.f32 0.0, %v2223
          %v2225 = vpop.f32.mrb[0].mxu0
          %v2226 = vpop.f32.mrb[0].mxu0
          %v2227 = vadd.f32 0.0, %v2226
          %v2228 = vpop.f32.mrb[0].mxu0
          %2229 = vmatprep.mubr.bf16.mxu0 0
          %2230 = vmatmul.mubr.bf16.gmra.mrb[0].mxu0 %v2089
          %v2231 = vpop.f32.mrb[0].mxu0
          %v2232 = vadd.f32 0.0, %v2231
          %v2233 = vpop.f32.mrb[0].mxu0
          %v2234 = vpop.f32.mrb[0].mxu0
          %v2235 = vadd.f32 0.0, %v2234
          %v2236 = vpop.f32.mrb[0].mxu0
          %2237 = vmatprep.mubr.bf16.mxu0 0
          %2238 = vmatmul.mubr.bf16.gmra.mrb[0].mxu0 %v2090
          %v2239 = vpop.f32.mrb[0].mxu0
          %v2240 = vadd.f32 0.0, %v2239
          %v2241 = vpop.f32.mrb[0].mxu0
          %v2242 = vpop.f32.mrb[0].mxu0
          %v2243 = vadd.f32 0.0, %v2242
          %v2244 = vpop.f32.mrb[0].mxu0
          %2245 = vmatprep.mubr.bf16.mxu0 0
          %2246 = vmatmul.mubr.bf16.gmra.mrb[0].mxu0 %v2091
          %v2247 = vpop.f32.mrb[0].mxu0
          %v2248 = vadd.f32 0.0, %v2247
          %v2249 = vpop.f32.mrb[0].mxu0
          %v2250 = vpop.f32.mrb[0].mxu0
          %v2251 = vadd.f32 0.0, %v2250
          %v2252 = vpop.f32.mrb[0].mxu0
          %2253 = vmatprep.mubr.bf16.mxu0 0
          %2254 = vmatmul.mubr.bf16.gmra.mrb[0].mxu0 %v2092
          %v2255 = vpop.f32.mrb[0].mxu0
          %v2256 = vadd.f32 0.0, %v2255
          %v2257 = vpop.f32.mrb[0].mxu0
          %v2258 = vpop.f32.mrb[0].mxu0
          %v2259 = vadd.f32 0.0, %v2258
          %v2260 = vpop.f32.mrb[0].mxu0
          %2261 = vmatprep.mubr.bf16.mxu0 0
          %2262 = vmatmul.mubr.bf16.gmra.mrb[0].mxu0 %v2093
          %v2263 = vpop.f32.mrb[0].mxu0
          %v2264 = vadd.f32 0.0, %v2263
          %v2265 = vpop.f32.mrb[0].mxu0
          %v2266 = vpop.f32.mrb[0].mxu0
          %v2267 = vadd.f32 0.0, %v2266
          %v2268 = vpop.f32.mrb[0].mxu0
          %2269 = vmatprep.mubr.bf16.mxu0 0
          %2270 = vmatmul.mubr.bf16.gmra.mrb[0].mxu0 %v2094
          %v2271 = vpop.f32.mrb[0].mxu0
          %v2272 = vadd.f32 0.0, %v2271
          %v2273 = vpop.f32.mrb[0].mxu0
          %v2274 = vpop.f32.mrb[0].mxu0
          %v2275 = vadd.f32 0.0, %v2274
          %v2276 = vpop.f32.mrb[0].mxu0
          %2277 = vmatprep.mubr.bf16.mxu0 0
          %2278 = vmatmul.mubr.bf16.gmra.mrb[0].mxu0 %v2095
          %v2279 = vpop.f32.mrb[0].mxu0
          %v2280 = vadd.f32 0.0, %v2279
          %v2281 = vpop.f32.mrb[0].mxu0
          %v2282 = vpop.f32.mrb[0].mxu0
          %v2283 = vadd.f32 0.0, %v2282
          %v2284 = vpop.f32.mrb[0].mxu0
          %2285 = vmatprep.mubr.bf16.mxu0 0
          %2286 = vmatmul.mubr.bf16.gmra.mrb[0].mxu0 %v2096
          %v2287 = vpop.f32.mrb[0].mxu0
          %v2288 = vadd.f32 0.0, %v2287
          %v2289 = vpop.f32.mrb[0].mxu0
          %v2290 = vpop.f32.mrb[0].mxu0
          %v2291 = vadd.f32 0.0, %v2290
          %v2292 = vpop.f32.mrb[0].mxu0
          %2293 = vmatprep.mubr.bf16.mxu0 0
          %2294 = vmatmul.mubr.bf16.gmra.mrb[0].mxu0 %v2097
          %v2295 = vpop.f32.mrb[0].mxu0
          %v2296 = vadd.f32 0.0, %v2295
          %v2297 = vpop.f32.mrb[0].mxu0
          %v2298 = vpop.f32.mrb[0].mxu0
          %v2299 = vadd.f32 0.0, %v2298
          %v2300 = vpop.f32.mrb[0].mxu0
          %2301 = vmatprep.mubr.bf16.mxu0 0
          %2302 = vmatmul.mubr.bf16.gmra.mrb[0].mxu0 %v2098
          %v2303 = vpop.f32.mrb[0].mxu0
          %v2304 = vadd.f32 0.0, %v2303
          %v2305 = vpop.f32.mrb[0].mxu0
          %v2306 = vpop.f32.mrb[0].mxu0
          %v2307 = vadd.f32 0.0, %v2306
          %v2308 = vpop.f32.mrb[0].mxu0
          %2309 = vmatprep.mubr.bf16.mxu0 0
          %2310 = vmatmul.mubr.bf16.gmra.mrb[0].mxu0 %v2099
          %v2311 = vpop.f32.mrb[0].mxu0
          %v2312 = vadd.f32 0.0, %v2311
          %v2313 = vpop.f32.mrb[0].mxu0
          %v2314 = vpop.f32.mrb[0].mxu0
          %v2315 = vadd.f32 0.0, %v2314
          %v2316 = vpop.f32.mrb[0].mxu0
          %2317 = vmatprep.mubr.bf16.mxu0 0
          %2318 = vmatmul.mubr.bf16.gmra.mrb[0].mxu0 %v2100
          %v2319 = vpop.f32.mrb[0].mxu0
          %v2320 = vadd.f32 0.0, %v2319
          %v2321 = vpop.f32.mrb[0].mxu0
          %v2322 = vpop.f32.mrb[0].mxu0
          %v2323 = vadd.f32 0.0, %v2322
          %v2324 = vpop.f32.mrb[0].mxu0
          %2325 = vdwg.mxu0
          %v2326 = vpack.c.bf16 %v2203, %v2200
          %v2327 = vpack.c.bf16 %v2211, %v2208
          %v2328 = vpack.c.bf16 %v2219, %v2216
          %v2329 = vpack.c.bf16 %v2227, %v2224
          %v2330 = vpack.c.bf16 %v2235, %v2232
          %v2331 = vpack.c.bf16 %v2243, %v2240
          %v2332 = vpack.c.bf16 %v2251, %v2248
          %v2333 = vpack.c.bf16 %v2259, %v2256
          %v2334 = vpack.c.bf16 %v2267, %v2264
          %v2335 = vpack.c.bf16 %v2275, %v2272
          %v2336 = vpack.c.bf16 %v2283, %v2280
          %v2337 = vpack.c.bf16 %v2291, %v2288
          %v2338 = vpack.c.bf16 %v2299, %v2296
          %v2339 = vpack.c.bf16 %v2307, %v2304
          %v2340 = vpack.c.bf16 %v2315, %v2312
          %v2341 = vpack.c.bf16 %v2323, %v2320
          %s2342 = sshra.s32 %s2084, 4
          %s2343 = sand.u32 %s2084, 15
          %s2344 = smul.addr %s2342, 8
          %s2345 = scalar_lea.vmem [#allocation3], %s2344
          %2346 = vst [vmem:[%s2345] sm:$0xff] %v2326
          %2347 = vst [vmem:[%s2345 + $0x8] sm:$0xff] %v2327
          %2348 = vst [vmem:[%s2345 + $0x10] sm:$0xff] %v2328
          %2349 = vst [vmem:[%s2345 + $0x18] sm:$0xff] %v2329
          %2350 = vst [vmem:[%s2345 + $0x20] sm:$0xff] %v2330
          %2351 = vst [vmem:[%s2345 + $0x28] sm:$0xff] %v2331
          %2352 = vst [vmem:[%s2345 + $0x30] sm:$0xff] %v2332
          %2353 = vst [vmem:[%s2345 + $0x38] sm:$0xff] %v2333
          %2354 = vst [vmem:[%s2345 + $0x40] sm:$0xff] %v2334
          %2355 = vst [vmem:[%s2345 + $0x48] sm:$0xff] %v2335
          %2356 = vst [vmem:[%s2345 + $0x50] sm:$0xff] %v2336
          %2357 = vst [vmem:[%s2345 + $0x58] sm:$0xff] %v2337
          %2358 = vst [vmem:[%s2345 + $0x60] sm:$0xff] %v2338
          %2359 = vst [vmem:[%s2345 + $0x68] sm:$0xff] %v2339
          %2360 = vst [vmem:[%s2345 + $0x70] sm:$0xff] %v2340
          %2361 = vst [vmem:[%s2345 + $0x78] sm:$0xff] %v2341
        $region80: #{tpu_custom_call.1} parent=43 // pred_fallthru
          _
        %p2362 = pnand %p1535, %p1976
        %p2363 = pneg %p2362
        // Predicated region
        $region81: #{tpu_custom_call.1} parent=43 // pred_check
          _
        $region82: #{tpu_custom_call.1} parent=43 // pred_check_branch
          %2365 = sbr.rel (%p2362) target = $region84
        $region83: #{tpu_custom_call.1} parent=43 // pred_region
          %v2366 = vld [vmem:[#allocation4] sm:$0xff]
          %v2367 = vld [vmem:[#allocation4 + $0x8] sm:$0xff]
          %v2368 = vld [vmem:[#allocation4 + $0x10] sm:$0xff]
          %v2369 = vld [vmem:[#allocation4 + $0x18] sm:$0xff]
          %v2370 = vld [vmem:[#allocation4 + $0x20] sm:$0xff]
          %v2371 = vld [vmem:[#allocation4 + $0x28] sm:$0xff]
          %v2372 = vld [vmem:[#allocation4 + $0x30] sm:$0xff]
          %v2373 = vld [vmem:[#allocation4 + $0x38] sm:$0xff]
          %v2374 = vld [vmem:[#allocation4 + $0x40] sm:$0xff]
          %v2375 = vld [vmem:[#allocation4 + $0x48] sm:$0xff]
          %v2376 = vld [vmem:[#allocation4 + $0x50] sm:$0xff]
          %v2377 = vld [vmem:[#allocation4 + $0x58] sm:$0xff]
          %v2378 = vld [vmem:[#allocation4 + $0x60] sm:$0xff]
          %v2379 = vld [vmem:[#allocation4 + $0x68] sm:$0xff]
          %v2380 = vld [vmem:[#allocation4 + $0x70] sm:$0xff]
          %v2381 = vld [vmem:[#allocation4 + $0x78] sm:$0xff]
          %v2382 = vld [vmem:[#allocation4 + $0x80] sm:$0xff]
          %v2383 = vld [vmem:[#allocation4 + $0x88] sm:$0xff]
          %v2384 = vld [vmem:[#allocation4 + $0x90] sm:$0xff]
          %v2385 = vld [vmem:[#allocation4 + $0x98] sm:$0xff]
          %v2386 = vld [vmem:[#allocation4 + $0xa0] sm:$0xff]
          %v2387 = vld [vmem:[#allocation4 + $0xa8] sm:$0xff]
          %v2388 = vld [vmem:[#allocation4 + $0xb0] sm:$0xff]
          %v2389 = vld [vmem:[#allocation4 + $0xb8] sm:$0xff]
          %v2390 = vld [vmem:[#allocation4 + $0xc0] sm:$0xff]
          %v2391 = vld [vmem:[#allocation4 + $0xc8] sm:$0xff]
          %v2392 = vld [vmem:[#allocation4 + $0xd0] sm:$0xff]
          %v2393 = vld [vmem:[#allocation4 + $0xd8] sm:$0xff]
          %v2394 = vld [vmem:[#allocation4 + $0xe0] sm:$0xff]
          %v2395 = vld [vmem:[#allocation4 + $0xe8] sm:$0xff]
          %v2396 = vld [vmem:[#allocation4 + $0xf0] sm:$0xff]
          %v2397 = vld [vmem:[#allocation4 + $0xf8] sm:$0xff]
          %v2398 = vld [vmem:[%s5] sm:$0x1]
          %v2400 = vlaneseq
          %v2401 = vshrl.u32 %v2400, 7
          %v2402 = vsub.s32 0, %v2401
          %v2403 = vrot.slane %v2398, %v2402
          %v2405 = vadd.f32 %v2366, %v2403
          %v2406 = vadd.f32 %v2367, %v2403
          %v2407 = vadd.f32 %v2368, %v2403
          %v2408 = vadd.f32 %v2369, %v2403
          %v2409 = vadd.f32 %v2370, %v2403
          %v2410 = vadd.f32 %v2371, %v2403
          %v2411 = vadd.f32 %v2372, %v2403
          %v2412 = vadd.f32 %v2373, %v2403
          %v2413 = vadd.f32 %v2374, %v2403
          %v2414 = vadd.f32 %v2375, %v2403
          %v2415 = vadd.f32 %v2376, %v2403
          %v2416 = vadd.f32 %v2377, %v2403
          %v2417 = vadd.f32 %v2378, %v2403
          %v2418 = vadd.f32 %v2379, %v2403
          %v2419 = vadd.f32 %v2380, %v2403
          %v2420 = vadd.f32 %v2381, %v2403
          %v2421 = vadd.f32 %v2382, %v2403
          %v2422 = vadd.f32 %v2383, %v2403
          %v2423 = vadd.f32 %v2384, %v2403
          %v2424 = vadd.f32 %v2385, %v2403
          %v2425 = vadd.f32 %v2386, %v2403
          %v2426 = vadd.f32 %v2387, %v2403
          %v2427 = vadd.f32 %v2388, %v2403
          %v2428 = vadd.f32 %v2389, %v2403
          %v2429 = vadd.f32 %v2390, %v2403
          %v2430 = vadd.f32 %v2391, %v2403
          %v2431 = vadd.f32 %v2392, %v2403
          %v2432 = vadd.f32 %v2393, %v2403
          %v2433 = vadd.f32 %v2394, %v2403
          %v2434 = vadd.f32 %v2395, %v2403
          %v2435 = vadd.f32 %v2396, %v2403
          %v2436 = vadd.f32 %v2397, %v2403
          %2437 = vst [vmem:[%s339] sm:$0xff] %v2405
          %2438 = vst [vmem:[%s339 + $0x8] sm:$0xff] %v2406
          %2439 = vst [vmem:[%s339 + $0x10] sm:$0xff] %v2407
          %2440 = vst [vmem:[%s339 + $0x18] sm:$0xff] %v2408
          %2441 = vst [vmem:[%s339 + $0x20] sm:$0xff] %v2409
          %2442 = vst [vmem:[%s339 + $0x28] sm:$0xff] %v2410
          %2443 = vst [vmem:[%s339 + $0x30] sm:$0xff] %v2411
          %2444 = vst [vmem:[%s339 + $0x38] sm:$0xff] %v2412
          %2445 = vst [vmem:[%s339 + $0x40] sm:$0xff] %v2413
          %2446 = vst [vmem:[%s339 + $0x48] sm:$0xff] %v2414
          %2447 = vst [vmem:[%s339 + $0x50] sm:$0xff] %v2415
          %2448 = vst [vmem:[%s339 + $0x58] sm:$0xff] %v2416
          %2449 = vst [vmem:[%s339 + $0x60] sm:$0xff] %v2417
          %2450 = vst [vmem:[%s339 + $0x68] sm:$0xff] %v2418
          %2451 = vst [vmem:[%s339 + $0x70] sm:$0xff] %v2419
          %2452 = vst [vmem:[%s339 + $0x78] sm:$0xff] %v2420
          %2453 = vst [vmem:[%s339 + $0x80] sm:$0xff] %v2421
          %2454 = vst [vmem:[%s339 + $0x88] sm:$0xff] %v2422
          %2455 = vst [vmem:[%s339 + $0x90] sm:$0xff] %v2423
          %2456 = vst [vmem:[%s339 + $0x98] sm:$0xff] %v2424
          %2457 = vst [vmem:[%s339 + $0xa0] sm:$0xff] %v2425
          %2458 = vst [vmem:[%s339 + $0xa8] sm:$0xff] %v2426
          %2459 = vst [vmem:[%s339 + $0xb0] sm:$0xff] %v2427
          %2460 = vst [vmem:[%s339 + $0xb8] sm:$0xff] %v2428
          %2461 = vst [vmem:[%s339 + $0xc0] sm:$0xff] %v2429
          %2462 = vst [vmem:[%s339 + $0xc8] sm:$0xff] %v2430
          %2463 = vst [vmem:[%s339 + $0xd0] sm:$0xff] %v2431
          %2464 = vst [vmem:[%s339 + $0xd8] sm:$0xff] %v2432
          %2465 = vst [vmem:[%s339 + $0xe0] sm:$0xff] %v2433
          %2466 = vst [vmem:[%s339 + $0xe8] sm:$0xff] %v2434
          %2467 = vst [vmem:[%s339 + $0xf0] sm:$0xff] %v2435
          %2468 = vst [vmem:[%s339 + $0xf8] sm:$0xff] %v2436
        $region84: #{tpu_custom_call.1} parent=43 // pred_fallthru
          _
        %s2469 = sand.u32 %s187, 1
        %s2470 = scalar_lea.sflag [#allocation7], %s2469
        %s2471 = sand.u32 %s187, 1
        %s2472 = smul.addr %s2471, 256
        %s2473 = scalar_lea.vmem [#allocation13], %s2472
        // Predicated region
        $region85: #{tpu_custom_call.1} parent=43 // pred_check
          %p2474 = pneg %p197
        $region86: #{tpu_custom_call.1} parent=43 // pred_check_branch
          %2476 = sbr.rel (%p2474) target = $region88
        $region87: #{tpu_custom_call.1} parent=43 // pred_region
          %s2477 = smul.u32 %s31, %s30
          %s2478 = smul.u32 32, %s2477
          %s2480 = ssub.s32 4096, 4096
          %2481 = vsyncadd %s2470, %s2480
          %s2482 = smul.addr %s2478, 128
          %s2483 = scalar_lea.hbm %s6, %s2482
          %s2484 = sshll.u32 %s2473, 4
          %s2485 = int_to_ptr.vmem [resolvable:$true] %s2484
          %2490 = dma.vmem_to_hbm [thread:$0]  %s2485, 4096, %s2483, %s2470, 128, 128, 8
        $region88: #{tpu_custom_call.1} parent=43 // pred_fallthru
          _
      $region44: #{tpu_custom_call.1} parent=5 // pred_fallthru
        _
      %p2491 = scmp.le.s32.totalorder 2, %s20
      // Predicated region
      $region89: #{tpu_custom_call.1} parent=5 // pred_check
        %p2492 = pneg %p2491
      $region90: #{tpu_custom_call.1} parent=5 // pred_check_branch
        %2494 = sbr.rel (%p2492) target = $region92
      $region91: #{tpu_custom_call.1} parent=5 // pred_region
        %s2495 = ssub.s32 %s20, 2
        // Predicated region
        $region93: #{tpu_custom_call.1} parent=91 // pred_check
          %p2496 = pneg %p203
        $region94: #{tpu_custom_call.1} parent=91 // pred_check_branch
          %2498 = sbr.rel (%p2496) target = $region96
        $region95: #{tpu_custom_call.1} parent=91 // pred_region
          %s2499 = sand.u32 %s188, 1
          %s2500 = scalar_lea.sflag [#allocation7], %s2499
          %s2501 = sand.u32 %s188, 1
          %s2502 = smul.addr %s2501, 256
          %s2503 = scalar_lea.vmem [#allocation13], %s2502
          %2504 = dma.done %s2500, 4096
        $region96: #{tpu_custom_call.1} parent=91 // pred_fallthru
          _
      $region92: #{tpu_custom_call.1} parent=5 // pred_fallthru
        _
    $region6: #{tpu_custom_call.1} parent=1 // loop_footer
      %s24 = sadd.s32 1, %s20
    $region7: #{tpu_custom_call.1} parent=1 // loop_footer_branch
      %19 = sbr.rel target = $region3
    $region8: #{tpu_custom_call.1} parent=1 // loop_exit
      _
    %2505 = vsyncpa [#allocation6], 1
    %s2506 = scalar_lea.sflag [#allocation6], 1
    %2507 = vsyncpa %s2506, 1
    %2508 = vsyncpa [#allocation9], 1
    %2509 = vsyncpa [#allocation12], 1
    %2510 = vsyncpa [#allocation7], 1
    %s2511 = scalar_lea.sflag [#allocation7], 1
    %2512 = vsyncpa %s2511, 1

</llo_original>
